<compile_context>
chip_gen: v6e
topology: v6e:2x2x1
jax: 0.10.0
libtpu: 0.0.40
codegen_flags: <defaults>
</compile_context>

<pallas_src>
import functools

import jax
import jax.numpy as jnp
from jax import lax
from jax.experimental import pallas as pl
from jax.experimental.pallas import tpu as pltpu


def _shortcut_kernel(x_ref, o_ref, *, pad, hh, wh):
    # x_ref: (nb, c_in, H, W)      o_ref: (nb, c_in + 2*pad, hh, wh)
    nb, c_in, _, w = x_ref.shape

    # ---- H stride-2: strided ref read on the second-minor (sublane) dim. ----
    xh = x_ref[:, :, pl.ds(0, hh, 2), :]                    # (nb, c_in, hh, W)

    # ---- W stride-2: lane compaction on the MXU with a 0/1 selection matrix. ----
    nbc = nb * c_in
    xh3 = xh.reshape(nbc, hh, w)                            # merge major dims: free
    # Zero the discarded (odd) lanes so nothing there can leak into the output.
    lane = lax.broadcasted_iota(jnp.int32, (nbc, hh, w), 2)
    xh3 = jnp.where(lane % 2 == 0, xh3, 0).astype(jnp.float32)
    out_idx = lax.broadcasted_iota(jnp.int32, (wh, w), 0)
    in_idx = lax.broadcasted_iota(jnp.int32, (wh, w), 1)
    sel_t = (in_idx == 2 * out_idx).astype(jnp.float32)     # (wh, W), sel_t[j, 2j] = 1
    sel_t3 = jnp.broadcast_to(sel_t, (nbc, wh, w))
    sub3 = jnp.einsum(
        "bhw,bjw->bhj", xh3, sel_t3,
        preferred_element_type=jnp.float32,
        precision=lax.Precision.HIGHEST)                    # (nbc, hh, wh): exact copy
    sub = sub3.reshape(nb, c_in, hh, wh).astype(o_ref.dtype)

    # ---- channel zero-pad built in vregs, single full-block store. ----
    if pad > 0:
        z = jnp.zeros((nb, pad, hh, wh), dtype=o_ref.dtype)
        o_ref[...] = jnp.concatenate([z, sub, z], axis=1)
    else:
        o_ref[...] = sub


def _largest_divisor_leq(n, cap):
    cap = max(1, min(cap, n))
    for d in range(cap, 0, -1):
        if n % d == 0:
            return d
    return 1


def lambda_layer_option_a(x_nchw, planes):
    """Pallas equivalent of
       LambdaLayer(lambda x: F.pad(x[:, :, ::2, ::2],
                                   (0,0,0,0, planes//4, planes//4), "constant", 0)).
    Input and output are NCHW (PyTorch convention); no layout glue is performed."""
    n, c, h, w = x_nchw.shape
    pad = planes // 4
    c_out = c + 2 * pad
    hh, wh = (h + 1) // 2, (w + 1) // 2   # ceil: matches PyTorch `::2` for odd H/W

    # Batch-chunk size: big blocks to amortize per-grid-step overhead, capped so
    # (in + out, double-buffered) stays far below the 32 MiB scoped-VMEM budget
    # (v7x has only 64 MiB physical), and capped to keep >= 2 grid steps when the
    # batch allows so v7x's two TensorCores both get work.
    itemsize = jnp.dtype(x_nchw.dtype).itemsize
    per_item = (c * h * w + c_out * hh * wh) * itemsize
    cap = max(1, (2 * 1024 * 1024) // per_item)
    if n >= 2:
        cap = min(cap, n // 2)
    nb = _largest_divisor_leq(n, cap)

    kernel = functools.partial(_shortcut_kernel, pad=pad, hh=hh, wh=wh)
    return pl.pallas_call(
        kernel,
        out_shape=jax.ShapeDtypeStruct((n, c_out, hh, wh), x_nchw.dtype),
        grid=(n // nb,),
        in_specs=[pl.BlockSpec((nb, c, h, w), lambda i: (i, 0, 0, 0))],
        out_specs=pl.BlockSpec((nb, c_out, hh, wh), lambda i: (i, 0, 0, 0)),
        compiler_params=pltpu.CompilerParams(
            dimension_semantics=("parallel",),
            vmem_limit_bytes=32 * 1024 * 1024,
        ),
    )(x_nchw)


if __name__ == "__main__":
    key = jax.random.PRNGKey(0)
    k1, k2 = jax.random.split(key)

    # Small config implied by the module's forward (NCHW input).
    x = jax.random.normal(k1, (2, 4, 16, 16), dtype=jnp.float32)
    planes = 8
    out = jax.block_until_ready(lambda_layer_option_a(x, planes))
    ref = jnp.pad(x[:, :, ::2, ::2],
                  ((0, 0), (planes // 4, planes // 4), (0, 0), (0, 0)))
    assert out.shape == ref.shape, (out.shape, ref.shape)
    assert out.dtype == ref.dtype
    assert jnp.allclose(out, ref), float(jnp.max(jnp.abs(out - ref)))

    # CIFAR-ResNet-sized shortcut: exercises nb > 1 and a multi-step parallel grid.
    x2 = jax.random.normal(k2, (8, 16, 32, 32), dtype=jnp.float32)
    planes2 = 32
    out2 = jax.block_until_ready(lambda_layer_option_a(x2, planes2))
    ref2 = jnp.pad(x2[:, :, ::2, ::2],
                   ((0, 0), (planes2 // 4, planes2 // 4), (0, 0), (0, 0)))
    assert out2.shape == ref2.shape
    assert jnp.allclose(out2, ref2)

    print("KERNEL_OK")
</pallas_src>

<mosaic_0001>
module attributes {stable_mosaic.version = 11 : i64} {
  func.func @_shortcut_kernel(%arg0: i32, %arg1: memref<1x4x16x16xf32, #tpu.memory_space<vmem>>, %arg2: memref<1x8x8x8xf32, #tpu.memory_space<vmem>>) attributes {dimension_semantics = [#tpu.dimension_semantics<parallel>], iteration_bounds = array<i64: 2>, scalar_prefetch = 0 : i64, scratch_operands = 0 : i64, tpu.core_type = #tpu.core_type<tc>, window_params = [{transform_indices = @transform_0, window_bounds = array<i64: 1, 4, 16, 16>}, {transform_indices = @transform_1, window_bounds = array<i64: 1, 8, 8, 8>}]} {
    %c0 = arith.constant 0 : index
    %c0_0 = arith.constant 0 : index
    %c0_1 = arith.constant 0 : index
    %c0_2 = arith.constant 0 : index
    %0 = tpu.strided_load %arg1[%c0, %c0_0, %c0_1, %c0_2] {strides = array<i32: 1, 1, 2, 1>} : memref<1x4x16x16xf32, #tpu.memory_space<vmem>>, vector<1x4x8x16xf32>
    %1 = vector.shape_cast %0 : vector<1x4x8x16xf32> to vector<4x8x16xf32>
    %2 = tpu.iota {dimensions = array<i32: 2>} : vector<4x8x16xi32>
    %c2_i32 = arith.constant 2 : i32
    %c0_i32 = arith.constant 0 : i32
    %3 = arith.cmpi eq, %c2_i32, %c0_i32 : i32
    %c1_i32 = arith.constant 1 : i32
    %4 = arith.select %3, %c1_i32, %c2_i32 : i32
    %5 = vector.broadcast %4 : i32 to vector<4x8x16xi32>
    %6 = arith.remsi %2, %5 : vector<4x8x16xi32>
    %c0_i32_3 = arith.constant 0 : i32
    %7 = vector.broadcast %c0_i32_3 : i32 to vector<4x8x16xi32>
    %8 = arith.cmpi ne, %6, %7 : vector<4x8x16xi32>
    %c0_i32_4 = arith.constant 0 : i32
    %9 = vector.broadcast %c0_i32_4 : i32 to vector<4x8x16xi32>
    %10 = arith.cmpi slt, %6, %9 : vector<4x8x16xi32>
    %c0_i32_5 = arith.constant 0 : i32
    %11 = arith.cmpi slt, %4, %c0_i32_5 : i32
    %12 = vector.broadcast %11 : i1 to vector<4x8x16xi1>
    %13 = vector.broadcast %12 : vector<4x8x16xi1> to vector<4x8x16xi1>
    %14 = arith.xori %10, %13 : vector<4x8x16xi1>
    %15 = arith.andi %14, %8 : vector<4x8x16xi1>
    %16 = vector.broadcast %4 : i32 to vector<4x8x16xi32>
    %17 = arith.addi %6, %16 : vector<4x8x16xi32>
    %18 = arith.select %15, %17, %6 : vector<4x8x16xi1>, vector<4x8x16xi32>
    %c0_i32_6 = arith.constant 0 : i32
    %19 = vector.broadcast %c0_i32_6 : i32 to vector<4x8x16xi32>
    %20 = arith.cmpi eq, %18, %19 : vector<4x8x16xi32>
    %c0_i32_7 = arith.constant 0 : i32
    %21 = arith.sitofp %c0_i32_7 : i32 to f32
    %22 = vector.broadcast %21 : f32 to vector<4x8x16xf32>
    %23 = arith.select %20, %1, %22 : vector<4x8x16xi1>, vector<4x8x16xf32>
    %24 = tpu.iota {dimensions = array<i32: 0>} : vector<8x16xi32>
    %25 = tpu.iota {dimensions = array<i32: 1>} : vector<8x16xi32>
    %c2_i32_8 = arith.constant 2 : i32
    %26 = vector.broadcast %c2_i32_8 : i32 to vector<8x16xi32>
    %27 = arith.muli %26, %24 : vector<8x16xi32>
    %28 = arith.cmpi eq, %25, %27 : vector<8x16xi32>
    %29 = arith.extui %28 : vector<8x16xi1> to vector<8x16xi32>
    %30 = arith.sitofp %29 : vector<8x16xi32> to vector<8x16xf32>
    %31 = vector.shape_cast %30 : vector<8x16xf32> to vector<1x8x16xf32>
    %32 = vector.broadcast %31 : vector<1x8x16xf32> to vector<4x8x16xf32>
    "tpu.trace_start"() <{level = 10 : i32, message = "bhw,bjw->bhj"}> : () -> ()
    %cst = arith.constant dense<0.000000e+00> : vector<4x8x8xf32>
    %33 = tpu.matmul %23, %32, %cst {dimension_numbers = #tpu.dot_dimension_numbers<[2], [2], [1], [1], [0, 0, 0, 1, 1, 1], [0], [0]>, precision = #tpu.contract_precision<fp32>} : vector<4x8x16xf32>, vector<4x8x16xf32>, vector<4x8x8xf32> -> vector<4x8x8xf32>
    "tpu.trace_stop"() : () -> ()
    %34 = vector.shape_cast %33 : vector<4x8x8xf32> to vector<1x4x8x8xf32>
    %cst_9 = arith.constant 0.000000e+00 : f32
    %35 = vector.broadcast %cst_9 : f32 to vector<1x2x8x8xf32>
    %36 = tpu.concatenate %35, %34, %35 in 1 : vector<1x2x8x8xf32>, vector<1x4x8x8xf32>, vector<1x2x8x8xf32> -> vector<1x8x8x8xf32>
    %c0_10 = arith.constant 0 : index
    %c0_11 = arith.constant 0 : index
    %c0_12 = arith.constant 0 : index
    %c0_13 = arith.constant 0 : index
    %37 = vector.load %arg2[%c0_10, %c0_11, %c0_12, %c0_13] : memref<1x8x8x8xf32, #tpu.memory_space<vmem>>, vector<1x8x8x8xf32>
    tpu.vector_store %arg2[%c0_10, %c0_11, %c0_12, %c0_13], %36 {strides = array<i32>} : memref<1x8x8x8xf32, #tpu.memory_space<vmem>>, vector<1x8x8x8xf32>,
    return
  }
  func.func @transform_0(%arg0: i32) -> (i32, i32, i32, i32) {
    %c0_i32 = arith.constant 0 : i32
    %c0_i32_0 = arith.constant 0 : i32
    %c0_i32_1 = arith.constant 0 : i32
    %c0_i32_2 = arith.constant 0 : i32
    return %arg0, %c0_i32, %c0_i32_0, %c0_i32_1 : i32, i32, i32, i32
  }
  func.func @transform_1(%arg0: i32) -> (i32, i32, i32, i32) {
    %c0_i32 = arith.constant 0 : i32
    %c0_i32_0 = arith.constant 0 : i32
    %c0_i32_1 = arith.constant 0 : i32
    %c0_i32_2 = arith.constant 0 : i32
    return %arg0, %c0_i32, %c0_i32_0, %c0_i32_1 : i32, i32, i32, i32
  }
}

</mosaic_0001>

<llo_original>
// kernel: tpu_custom_call.1
$region0: #{tpu_custom_call.1}
  #allocation0 [shape = 'u32[]', space=smem, size = 0x4, offset = 0x4, fixed_abs, tag = 'smem constant byte address 0x4 - core index']
  #allocation1 [shape = 'u32[144,128]{1,0:T(1,128)}', space=vmem, size = 0x12000, scoped, tag = 'internal scratch']
  %s0 = inlined_call_operand.hbm [shape: f32[2,4,16,16], index: 0, kind: input, shape index: {}]
  %s1 = inlined_call_operand.hbm [shape: f32[2,8,8,8], index: 1, kind: output, shape index: {}]
  %s2 = sld [smem:[#allocation0]]
  $region41: #{tpu_custom_call.1} parent=0
    _
  %s4 = ssub.s32 1, %s2
  %s5 = scalar_select 0, %s4, %s2
  $region1: #{tpu_custom_call.1} parent=0
    #allocation2 [shape = 'u8[65536]{0}', space=vmem, size = 0x10000, scoped, tag = 'input window, operand 0']
    #allocation3 [shape = 's32[2]{0}', space=sflag, size = 0x8, scoped, tag = 'scoped memory for tpu_custom_call.1']
    #allocation4 [shape = 's32[2]{0}', space=sflag, size = 0x8, scoped, tag = 'scoped memory for tpu_custom_call.1']
    #allocation5 [shape = 'u8[65536]{0}', space=vmem, size = 0x10000, scoped, tag = 'output window, operand 0']
    %6 = vsyncpa [#allocation3], 0
    %s7 = scalar_lea.sflag [#allocation3], 1
    %8 = vsyncpa %s7, 0
    %9 = vsyncpa [#allocation4], 0
    %s10 = scalar_lea.sflag [#allocation4], 1
    %11 = vsyncpa %s10, 0
    loop: start=0, step=1, limit=4
    $region2: #{tpu_custom_call.1} parent=1 // loop_pre_header
      _
    $region3: #{tpu_custom_call.1} parent=1 // loop_header
      %s13 = sphi 0, %s17
      %p14 = scmp.ge.s32.totalorder %s13, 4
      %s23 = sphi 0, %s25
      %s26 = sphi 0, %s23
      %s27 = sphi 0, %s26
      %s43 = sphi 0, %s27
      %s49 = sphi 0, %s51
      %s52 = sphi 0, %s49
      %s53 = sphi 0, %s52
      %s69 = sphi 0, %s53
    $region4: #{tpu_custom_call.1} parent=1 // loop_header_branch
      %16 = sbr.rel (%p14) target = $region8
    $region5: #{tpu_custom_call.1} parent=1 // loop_body
      %s18 = ssub.s32 %s13, 1
      %s19 = ssub.s32 %s13, 2
      %s20 = sadd.s32 %s13, 1
      %s21 = ssub.s32 %s13, %s20
      %p22 = scmp.eq.s32.totalorder %s21, 0
      %s24 = sadd.s32 %s23, 1
      %s25 = scalar_select %p22, %s23, %s24
      %p28 = pneg %p22
      %p29 = scmp.eq.s32.totalorder %s13, 1
      %p30 = por %p28, %p29
      %p31 = scmp.ne.s32.totalorder %s23, %s26
      %p32 = scmp.eq.s32.totalorder %s13, 0
      %p33 = por %p31, %p32
      %p34 = scmp.ne.s32.totalorder %s23, %s26
      %p35 = scmp.eq.s32.totalorder %s18, 1
      %p36 = por %p34, %p35
      %p37 = scmp.ne.s32.totalorder %s26, %s27
      %p38 = scmp.eq.s32.totalorder %s18, 0
      %p39 = por %p37, %p38
      %p40 = scmp.ne.s32.totalorder %s26, %s27
      %p41 = scmp.eq.s32.totalorder %s19, 1
      %p42 = por %p40, %p41
      %p44 = scmp.ne.s32.totalorder %s27, %s43
      %p45 = scmp.eq.s32.totalorder %s19, 0
      %p46 = por %p44, %p45
      %s47 = ssub.s32 %s13, %s20
      %p48 = scmp.eq.s32.totalorder %s47, 0
      %s50 = sadd.s32 %s49, 1
      %s51 = scalar_select %p48, %s49, %s50
      %p54 = pneg %p48
      %p55 = scmp.eq.s32.totalorder %s13, 1
      %p56 = por %p54, %p55
      %p57 = scmp.ne.s32.totalorder %s49, %s52
      %p58 = scmp.eq.s32.totalorder %s13, 0
      %p59 = por %p57, %p58
      %p60 = scmp.ne.s32.totalorder %s49, %s52
      %p61 = scmp.eq.s32.totalorder %s18, 1
      %p62 = por %p60, %p61
      %p63 = scmp.ne.s32.totalorder %s52, %s53
      %p64 = scmp.eq.s32.totalorder %s18, 0
      %p65 = por %p63, %p64
      %p66 = scmp.ne.s32.totalorder %s52, %s53
      %p67 = scmp.eq.s32.totalorder %s19, 1
      %p68 = por %p66, %p67
      %p70 = scmp.ne.s32.totalorder %s53, %s69
      %p71 = scmp.eq.s32.totalorder %s19, 0
      %p72 = por %p70, %p71
      %p73 = scmp.le.s32.totalorder 1, %s13
      %p74 = scmp.lt.s32.totalorder %s13, 3
      %p75 = pnand %p73, %p74
      %p76 = pneg %p75
      // Predicated region
      $region9: #{tpu_custom_call.1} parent=5 // pred_check
        _
      $region10: #{tpu_custom_call.1} parent=5 // pred_check_branch
        %78 = sbr.rel (%p75) target = $region12
      $region11: #{tpu_custom_call.1} parent=5 // pred_region
        %s79 = ssub.s32 %s13, 1
      $region12: #{tpu_custom_call.1} parent=5 // pred_fallthru
        _
      %p80 = scmp.lt.s32.totalorder %s13, 2
      // Predicated region
      $region13: #{tpu_custom_call.1} parent=5 // pred_check
        %p81 = pneg %p80
      $region14: #{tpu_custom_call.1} parent=5 // pred_check_branch
        %83 = sbr.rel (%p81) target = $region16
      $region15: #{tpu_custom_call.1} parent=5 // pred_region
        // Predicated region
        $region17: #{tpu_custom_call.1} parent=15 // pred_check
          %p84 = pneg %p33
        $region18: #{tpu_custom_call.1} parent=15 // pred_check_branch
          %86 = sbr.rel (%p84) target = $region20
        $region19: #{tpu_custom_call.1} parent=15 // pred_region
          %s87 = sand.u32 %s23, 1
          %s88 = scalar_lea.sflag [#allocation3], %s87
          %s89 = sand.u32 %s23, 1
          %s90 = smul.addr %s89, 64
          %s91 = scalar_lea.vmem [#allocation2], %s90
          %s93 = ssub.s32 1024, 1024
          %94 = vsyncadd %s88, %s93
          %s95 = smul.addr %s13, 8
          %s96 = smul.addr %s95, 128
          %s97 = scalar_lea.hbm %s0, %s96
          %s98 = sshll.u32 %s91, 4
          %s99 = int_to_ptr.vmem [resolvable:$true] %s98
          %104 = dma.hbm_to_vmem [thread:$0]  %s97, 1024, %s99, %s88, 128, 128, 8
        $region20: #{tpu_custom_call.1} parent=15 // pred_fallthru
          _
      $region16: #{tpu_custom_call.1} parent=5 // pred_fallthru
        _
      %p105 = scmp.le.s32.totalorder 1, %s13
      %p106 = scmp.lt.s32.totalorder %s13, 3
      %p107 = pnand %p105, %p106
      %p108 = pneg %p107
      // Predicated region
      $region21: #{tpu_custom_call.1} parent=5 // pred_check
        _
      $region22: #{tpu_custom_call.1} parent=5 // pred_check_branch
        %110 = sbr.rel (%p107) target = $region24
      $region23: #{tpu_custom_call.1} parent=5 // pred_region
        %s111 = ssub.s32 %s13, 1
        %s112 = sand.u32 %s26, 1
        %s113 = scalar_lea.sflag [#allocation3], %s112
        %s114 = sand.u32 %s26, 1
        %s115 = smul.addr %s114, 64
        %s116 = scalar_lea.vmem [#allocation2], %s115
        // Predicated region
        $region25: #{tpu_custom_call.1} parent=23 // pred_check
          %p117 = pneg %p39
        $region26: #{tpu_custom_call.1} parent=23 // pred_check_branch
          %119 = sbr.rel (%p117) target = $region28
        $region27: #{tpu_custom_call.1} parent=23 // pred_region
          %120 = dma.done %s113, 1024
        $region28: #{tpu_custom_call.1} parent=23 // pred_fallthru
          _
        %s121 = sand.u32 %s26, 1
        %s122 = scalar_lea.sflag [#allocation3], %s121
        %s123 = sand.u32 %s26, 1
        %s124 = smul.addr %s123, 64
        %s125 = scalar_lea.vmem [#allocation2], %s124
        %p126 = pneg %p39
        %p127 = pneg %p36
        %p128 = pneg %p65
        %p129 = pneg %p62
        %s130 = sand.u32 %s52, 1
        %s131 = scalar_lea.sflag [#allocation4], %s130
        %s132 = sand.u32 %s52, 1
        %s133 = smul.addr %s132, 64
        %s134 = scalar_lea.vmem [#allocation5], %s133
        %v135 = vld [vmem:[%s116] ss:$2 sm:$0xff]
        %s136 = scalar_lea.vmem %s116, 16 [#allocation2]
        %v137 = vld [vmem:[%s136] ss:$2 sm:$0xff]
        %s138 = scalar_lea.vmem %s116, 32 [#allocation2]
        %v139 = vld [vmem:[%s138] ss:$2 sm:$0xff]
        %s140 = scalar_lea.vmem %s116, 48 [#allocation2]
        %v141 = vld [vmem:[%s140] ss:$2 sm:$0xff]
        %v142 = vlaneseq
        %v143 = vand.u32 %v142, 127
        %vm144 = vcmp.lt.s32.totalorder %v143, 0
        %v145 = vsub.s32 0, %v143
        %v146 = vsel %vm144, %v145, %v143
        %v147 = vshrl.u32 %v146, 1
        %v148 = vand.u32 %v146, 1
        %v149 = vsub.s32 0, %v148
        %v150 = vsel %vm144, %v149, %v148
        %vm151 = vcmp.ne.s32.totalorder %v150, 0
        %vm152 = vcmp.lt.s32.totalorder %v150, 0
        %vm153 = vmand %vm152, %vm151
        %v154 = vadd.s32 %v150, 2
        %v155 = vsel %vm153, %v154, %v150
        %vm156 = vcmp.eq.s32.totalorder %v155, 0
        %v157 = vsel %vm156, %v135, 0.0
        %v158 = vsel %vm156, %v137, 0.0
        %v159 = vsel %vm156, %v139, 0.0
        %v160 = vsel %vm156, %v141, 0.0
        %v161 = vlaneseq
        %v162 = vshrl.u32 %v161, 7
        %v163 = vmul.u32 %v162, 2
        %vm164 = vcmp.eq.s32.totalorder %v143, %v163
        %v165 = vsel %vm164, 1, 0
        %v166 = vcvt.s32.f32 %v165
        %vm167 = vcmask 130048
        %v169 = vsel %vm167, %v157, 0
        %v172 = vsel %vm167, %v166, 0
        %174 = vmatprep.subr.mxu0 0.0
        %175 = vmatpush1.xpose.msra.mxu0 0.0
        %176 = vmatprep.subr.mxu0 0.0
        %177 = vmatpush1.xpose.msra.mxu0 0.0
        %178 = vmatprep.subr.mxu0 0.0
        %179 = vmatpush1.xpose.msra.mxu0 0.0
        %180 = vmatprep.subr.mxu0 0.0
        %181 = vmatpush1.xpose.msra.mxu0 0.0
        %182 = vmatprep.subr.mxu0 0.0
        %183 = vmatpush1.xpose.msra.mxu0 0.0
        %184 = vmatprep.subr.mxu0 0.0
        %185 = vmatpush1.xpose.msra.mxu0 0.0
        %186 = vmatprep.subr.mxu0 0.0
        %187 = vmatpush1.xpose.msra.mxu0 0.0
        %188 = vmatprep.subr.mxu0 0.0
        %189 = vmatpush1.xpose.msra.mxu0 0.0
        %190 = vmatprep.subr.mxu0 0.0
        %191 = vmatpush1.xpose.msra.mxu0 0.0
        %192 = vmatprep.subr.mxu0 0.0
        %193 = vmatpush1.xpose.msra.mxu0 0.0
        %194 = vmatprep.subr.mxu0 0.0
        %195 = vmatpush1.xpose.msra.mxu0 0.0
        %196 = vmatprep.subr.mxu0 0.0
        %197 = vmatpush1.xpose.msra.mxu0 0.0
        %198 = vmatprep.subr.mxu0 0.0
        %199 = vmatpush1.xpose.msra.mxu0 0.0
        %200 = vmatprep.subr.mxu0 0.0
        %201 = vmatpush1.xpose.msra.mxu0 0.0
        %202 = vmatprep.subr.mxu0 0.0
        %203 = vmatpush1.xpose.msra.mxu0 0.0
        %204 = vmatprep.subr.mxu0 0.0
        %v205 = vand.u32 %v172, 4294901760
        %206 = vmatpush1.xpose.msra.mxu0 %v205
        %207 = vmatprep.subr.mxu0 0.0
        %208 = vmatpush2.xpose.msra.mxu0 0.0
        %209 = vmatprep.subr.mxu0 0.0
        %210 = vmatpush2.xpose.msra.mxu0 0.0
        %211 = vmatprep.subr.mxu0 0.0
        %212 = vmatpush2.xpose.msra.mxu0 0.0
        %213 = vmatprep.subr.mxu0 0.0
        %214 = vmatpush2.xpose.msra.mxu0 0.0
        %215 = vmatprep.subr.mxu0 0.0
        %216 = vmatpush2.xpose.msra.mxu0 0.0
        %217 = vmatprep.subr.mxu0 0.0
        %218 = vmatpush2.xpose.msra.mxu0 0.0
        %219 = vmatprep.subr.mxu0 0.0
        %220 = vmatpush2.xpose.msra.mxu0 0.0
        %221 = vmatprep.subr.mxu0 0.0
        %222 = vmatpush2.xpose.msra.mxu0 0.0
        %223 = vmatprep.subr.mxu0 0.0
        %224 = vmatpush2.xpose.msra.mxu0 0.0
        %225 = vmatprep.subr.mxu0 0.0
        %226 = vmatpush2.xpose.msra.mxu0 0.0
        %227 = vmatprep.subr.mxu0 0.0
        %228 = vmatpush2.xpose.msra.mxu0 0.0
        %229 = vmatprep.subr.mxu0 0.0
        %230 = vmatpush2.xpose.msra.mxu0 0.0
        %231 = vmatprep.subr.mxu0 0.0
        %232 = vmatpush2.xpose.msra.mxu0 0.0
        %233 = vmatprep.subr.mxu0 0.0
        %234 = vmatpush2.xpose.msra.mxu0 0.0
        %235 = vmatprep.subr.mxu0 0.0
        %236 = vmatpush2.xpose.msra.mxu0 0.0
        %237 = vmatprep.subr.mxu0 0.0
        %238 = vmatpush2.xpose.msra.mxu0 0.0
        %239 = vmatprep.mubr.f32.mxu0 0.0
        %v240 = vand.u32 %v169, 4294901760
        %v241 = vsub.f32 %v169, %v240
        %v242 = vand.u32 %v241, 4294901760
        %v243 = vsub.f32 %v241, %v242
        %v244 = vand.u32 %v243, 4294901760
        %245 = vmatmul.mubr.f32.gmra.mxu0 %v244
        %v246 = vpop.f32.mrf.mxu0
        %v247 = vadd.f32 0.0, %v246
        %v248 = vpop.f32.mrf.mxu0
        %249 = vdwg.mxu0
        %250 = vmatprep.subr.mxu0 0.0
        %251 = vmatpush1.xpose.msra.mxu0 0.0
        %252 = vmatprep.subr.mxu0 0.0
        %253 = vmatpush1.xpose.msra.mxu0 0.0
        %254 = vmatprep.subr.mxu0 0.0
        %255 = vmatpush1.xpose.msra.mxu0 0.0
        %256 = vmatprep.subr.mxu0 0.0
        %257 = vmatpush1.xpose.msra.mxu0 0.0
        %258 = vmatprep.subr.mxu0 0.0
        %259 = vmatpush1.xpose.msra.mxu0 0.0
        %260 = vmatprep.subr.mxu0 0.0
        %261 = vmatpush1.xpose.msra.mxu0 0.0
        %262 = vmatprep.subr.mxu0 0.0
        %263 = vmatpush1.xpose.msra.mxu0 0.0
        %264 = vmatprep.subr.mxu0 0.0
        %265 = vmatpush1.xpose.msra.mxu0 0.0
        %266 = vmatprep.subr.mxu0 0.0
        %267 = vmatpush1.xpose.msra.mxu0 0.0
        %268 = vmatprep.subr.mxu0 0.0
        %269 = vmatpush1.xpose.msra.mxu0 0.0
        %270 = vmatprep.subr.mxu0 0.0
        %271 = vmatpush1.xpose.msra.mxu0 0.0
        %272 = vmatprep.subr.mxu0 0.0
        %273 = vmatpush1.xpose.msra.mxu0 0.0
        %274 = vmatprep.subr.mxu0 0.0
        %275 = vmatpush1.xpose.msra.mxu0 0.0
        %276 = vmatprep.subr.mxu0 0.0
        %277 = vmatpush1.xpose.msra.mxu0 0.0
        %278 = vmatprep.subr.mxu0 0.0
        %279 = vmatpush1.xpose.msra.mxu0 0.0
        %280 = vmatprep.subr.mxu0 0.0
        %v281 = vand.u32 %v172, 4294901760
        %v282 = vsub.f32 %v172, %v281
        %v283 = vand.u32 %v282, 4294901760
        %v284 = vsub.f32 %v282, %v283
        %v285 = vand.u32 %v284, 4294901760
        %286 = vmatpush1.xpose.msra.mxu0 %v285
        %287 = vmatprep.subr.mxu0 0.0
        %288 = vmatpush2.xpose.msra.mxu0 0.0
        %289 = vmatprep.subr.mxu0 0.0
        %290 = vmatpush2.xpose.msra.mxu0 0.0
        %291 = vmatprep.subr.mxu0 0.0
        %292 = vmatpush2.xpose.msra.mxu0 0.0
        %293 = vmatprep.subr.mxu0 0.0
        %294 = vmatpush2.xpose.msra.mxu0 0.0
        %295 = vmatprep.subr.mxu0 0.0
        %296 = vmatpush2.xpose.msra.mxu0 0.0
        %297 = vmatprep.subr.mxu0 0.0
        %298 = vmatpush2.xpose.msra.mxu0 0.0
        %299 = vmatprep.subr.mxu0 0.0
        %300 = vmatpush2.xpose.msra.mxu0 0.0
        %301 = vmatprep.subr.mxu0 0.0
        %302 = vmatpush2.xpose.msra.mxu0 0.0
        %303 = vmatprep.subr.mxu0 0.0
        %304 = vmatpush2.xpose.msra.mxu0 0.0
        %305 = vmatprep.subr.mxu0 0.0
        %306 = vmatpush2.xpose.msra.mxu0 0.0
        %307 = vmatprep.subr.mxu0 0.0
        %308 = vmatpush2.xpose.msra.mxu0 0.0
        %309 = vmatprep.subr.mxu0 0.0
        %310 = vmatpush2.xpose.msra.mxu0 0.0
        %311 = vmatprep.subr.mxu0 0.0
        %312 = vmatpush2.xpose.msra.mxu0 0.0
        %313 = vmatprep.subr.mxu0 0.0
        %314 = vmatpush2.xpose.msra.mxu0 0.0
        %315 = vmatprep.subr.mxu0 0.0
        %316 = vmatpush2.xpose.msra.mxu0 0.0
        %317 = vmatprep.subr.mxu0 0.0
        %318 = vmatpush2.xpose.msra.mxu0 0.0
        %319 = vmatprep.mubr.f32.mxu0 0.0
        %v320 = vand.u32 %v169, 4294901760
        %321 = vmatmul.mubr.f32.gmra.mxu0 %v320
        %v322 = vpop.f32.mrf.mxu0
        %v323 = vadd.f32 %v247, %v322
        %v324 = vpop.f32.mrf.mxu0
        %325 = vdwg.mxu0
        %326 = vmatprep.subr.mxu0 0.0
        %327 = vmatpush1.xpose.msra.mxu0 0.0
        %328 = vmatprep.subr.mxu0 0.0
        %329 = vmatpush1.xpose.msra.mxu0 0.0
        %330 = vmatprep.subr.mxu0 0.0
        %331 = vmatpush1.xpose.msra.mxu0 0.0
        %332 = vmatprep.subr.mxu0 0.0
        %333 = vmatpush1.xpose.msra.mxu0 0.0
        %334 = vmatprep.subr.mxu0 0.0
        %335 = vmatpush1.xpose.msra.mxu0 0.0
        %336 = vmatprep.subr.mxu0 0.0
        %337 = vmatpush1.xpose.msra.mxu0 0.0
        %338 = vmatprep.subr.mxu0 0.0
        %339 = vmatpush1.xpose.msra.mxu0 0.0
        %340 = vmatprep.subr.mxu0 0.0
        %341 = vmatpush1.xpose.msra.mxu0 0.0
        %342 = vmatprep.subr.mxu0 0.0
        %343 = vmatpush1.xpose.msra.mxu0 0.0
        %344 = vmatprep.subr.mxu0 0.0
        %345 = vmatpush1.xpose.msra.mxu0 0.0
        %346 = vmatprep.subr.mxu0 0.0
        %347 = vmatpush1.xpose.msra.mxu0 0.0
        %348 = vmatprep.subr.mxu0 0.0
        %349 = vmatpush1.xpose.msra.mxu0 0.0
        %350 = vmatprep.subr.mxu0 0.0
        %351 = vmatpush1.xpose.msra.mxu0 0.0
        %352 = vmatprep.subr.mxu0 0.0
        %353 = vmatpush1.xpose.msra.mxu0 0.0
        %354 = vmatprep.subr.mxu0 0.0
        %355 = vmatpush1.xpose.msra.mxu0 0.0
        %356 = vmatprep.subr.mxu0 0.0
        %v357 = vand.u32 %v172, 4294901760
        %v358 = vsub.f32 %v172, %v357
        %359 = vmatpush1.xpose.msra.mxu0 %v358
        %360 = vmatprep.subr.mxu0 0.0
        %361 = vmatpush2.xpose.msra.mxu0 0.0
        %362 = vmatprep.subr.mxu0 0.0
        %363 = vmatpush2.xpose.msra.mxu0 0.0
        %364 = vmatprep.subr.mxu0 0.0
        %365 = vmatpush2.xpose.msra.mxu0 0.0
        %366 = vmatprep.subr.mxu0 0.0
        %367 = vmatpush2.xpose.msra.mxu0 0.0
        %368 = vmatprep.subr.mxu0 0.0
        %369 = vmatpush2.xpose.msra.mxu0 0.0
        %370 = vmatprep.subr.mxu0 0.0
        %371 = vmatpush2.xpose.msra.mxu0 0.0
        %372 = vmatprep.subr.mxu0 0.0
        %373 = vmatpush2.xpose.msra.mxu0 0.0
        %374 = vmatprep.subr.mxu0 0.0
        %375 = vmatpush2.xpose.msra.mxu0 0.0
        %376 = vmatprep.subr.mxu0 0.0
        %377 = vmatpush2.xpose.msra.mxu0 0.0
        %378 = vmatprep.subr.mxu0 0.0
        %379 = vmatpush2.xpose.msra.mxu0 0.0
        %380 = vmatprep.subr.mxu0 0.0
        %381 = vmatpush2.xpose.msra.mxu0 0.0
        %382 = vmatprep.subr.mxu0 0.0
        %383 = vmatpush2.xpose.msra.mxu0 0.0
        %384 = vmatprep.subr.mxu0 0.0
        %385 = vmatpush2.xpose.msra.mxu0 0.0
        %386 = vmatprep.subr.mxu0 0.0
        %387 = vmatpush2.xpose.msra.mxu0 0.0
        %388 = vmatprep.subr.mxu0 0.0
        %389 = vmatpush2.xpose.msra.mxu0 0.0
        %390 = vmatprep.subr.mxu0 0.0
        %391 = vmatpush2.xpose.msra.mxu0 0.0
        %392 = vmatprep.mubr.f32.mxu0 0.0
        %v393 = vand.u32 %v169, 4294901760
        %v394 = vsub.f32 %v169, %v393
        %395 = vmatmul.mubr.f32.gmra.mxu0 %v394
        %v396 = vpop.f32.mrf.mxu0
        %v397 = vadd.f32 %v323, %v396
        %v398 = vpop.f32.mrf.mxu0
        %399 = vdwg.mxu0
        %400 = vmatprep.subr.mxu0 0.0
        %401 = vmatpush1.xpose.msra.mxu0 0.0
        %402 = vmatprep.subr.mxu0 0.0
        %403 = vmatpush1.xpose.msra.mxu0 0.0
        %404 = vmatprep.subr.mxu0 0.0
        %405 = vmatpush1.xpose.msra.mxu0 0.0
        %406 = vmatprep.subr.mxu0 0.0
        %407 = vmatpush1.xpose.msra.mxu0 0.0
        %408 = vmatprep.subr.mxu0 0.0
        %409 = vmatpush1.xpose.msra.mxu0 0.0
        %410 = vmatprep.subr.mxu0 0.0
        %411 = vmatpush1.xpose.msra.mxu0 0.0
        %412 = vmatprep.subr.mxu0 0.0
        %413 = vmatpush1.xpose.msra.mxu0 0.0
        %414 = vmatprep.subr.mxu0 0.0
        %415 = vmatpush1.xpose.msra.mxu0 0.0
        %416 = vmatprep.subr.mxu0 0.0
        %417 = vmatpush1.xpose.msra.mxu0 0.0
        %418 = vmatprep.subr.mxu0 0.0
        %419 = vmatpush1.xpose.msra.mxu0 0.0
        %420 = vmatprep.subr.mxu0 0.0
        %421 = vmatpush1.xpose.msra.mxu0 0.0
        %422 = vmatprep.subr.mxu0 0.0
        %423 = vmatpush1.xpose.msra.mxu0 0.0
        %424 = vmatprep.subr.mxu0 0.0
        %425 = vmatpush1.xpose.msra.mxu0 0.0
        %426 = vmatprep.subr.mxu0 0.0
        %427 = vmatpush1.xpose.msra.mxu0 0.0
        %428 = vmatprep.subr.mxu0 0.0
        %429 = vmatpush1.xpose.msra.mxu0 0.0
        %430 = vmatprep.subr.mxu0 0.0
        %v431 = vand.u32 %v172, 4294901760
        %432 = vmatpush1.xpose.msra.mxu0 %v431
        %433 = vmatprep.subr.mxu0 0.0
        %434 = vmatpush2.xpose.msra.mxu0 0.0
        %435 = vmatprep.subr.mxu0 0.0
        %436 = vmatpush2.xpose.msra.mxu0 0.0
        %437 = vmatprep.subr.mxu0 0.0
        %438 = vmatpush2.xpose.msra.mxu0 0.0
        %439 = vmatprep.subr.mxu0 0.0
        %440 = vmatpush2.xpose.msra.mxu0 0.0
        %441 = vmatprep.subr.mxu0 0.0
        %442 = vmatpush2.xpose.msra.mxu0 0.0
        %443 = vmatprep.subr.mxu0 0.0
        %444 = vmatpush2.xpose.msra.mxu0 0.0
        %445 = vmatprep.subr.mxu0 0.0
        %446 = vmatpush2.xpose.msra.mxu0 0.0
        %447 = vmatprep.subr.mxu0 0.0
        %448 = vmatpush2.xpose.msra.mxu0 0.0
        %449 = vmatprep.subr.mxu0 0.0
        %450 = vmatpush2.xpose.msra.mxu0 0.0
        %451 = vmatprep.subr.mxu0 0.0
        %452 = vmatpush2.xpose.msra.mxu0 0.0
        %453 = vmatprep.subr.mxu0 0.0
        %454 = vmatpush2.xpose.msra.mxu0 0.0
        %455 = vmatprep.subr.mxu0 0.0
        %456 = vmatpush2.xpose.msra.mxu0 0.0
        %457 = vmatprep.subr.mxu0 0.0
        %458 = vmatpush2.xpose.msra.mxu0 0.0
        %459 = vmatprep.subr.mxu0 0.0
        %460 = vmatpush2.xpose.msra.mxu0 0.0
        %461 = vmatprep.subr.mxu0 0.0
        %462 = vmatpush2.xpose.msra.mxu0 0.0
        %463 = vmatprep.subr.mxu0 0.0
        %464 = vmatpush2.xpose.msra.mxu0 0.0
        %465 = vmatprep.mubr.f32.mxu0 0.0
        %v466 = vand.u32 %v169, 4294901760
        %v467 = vsub.f32 %v169, %v466
        %v468 = vand.u32 %v467, 4294901760
        %469 = vmatmul.mubr.f32.gmra.mxu0 %v468
        %v470 = vpop.f32.mrf.mxu0
        %v471 = vadd.f32 %v397, %v470
        %v472 = vpop.f32.mrf.mxu0
        %473 = vdwg.mxu0
        %474 = vmatprep.subr.mxu0 0.0
        %475 = vmatpush1.xpose.msra.mxu0 0.0
        %476 = vmatprep.subr.mxu0 0.0
        %477 = vmatpush1.xpose.msra.mxu0 0.0
        %478 = vmatprep.subr.mxu0 0.0
        %479 = vmatpush1.xpose.msra.mxu0 0.0
        %480 = vmatprep.subr.mxu0 0.0
        %481 = vmatpush1.xpose.msra.mxu0 0.0
        %482 = vmatprep.subr.mxu0 0.0
        %483 = vmatpush1.xpose.msra.mxu0 0.0
        %484 = vmatprep.subr.mxu0 0.0
        %485 = vmatpush1.xpose.msra.mxu0 0.0
        %486 = vmatprep.subr.mxu0 0.0
        %487 = vmatpush1.xpose.msra.mxu0 0.0
        %488 = vmatprep.subr.mxu0 0.0
        %489 = vmatpush1.xpose.msra.mxu0 0.0
        %490 = vmatprep.subr.mxu0 0.0
        %491 = vmatpush1.xpose.msra.mxu0 0.0
        %492 = vmatprep.subr.mxu0 0.0
        %493 = vmatpush1.xpose.msra.mxu0 0.0
        %494 = vmatprep.subr.mxu0 0.0
        %495 = vmatpush1.xpose.msra.mxu0 0.0
        %496 = vmatprep.subr.mxu0 0.0
        %497 = vmatpush1.xpose.msra.mxu0 0.0
        %498 = vmatprep.subr.mxu0 0.0
        %499 = vmatpush1.xpose.msra.mxu0 0.0
        %500 = vmatprep.subr.mxu0 0.0
        %501 = vmatpush1.xpose.msra.mxu0 0.0
        %502 = vmatprep.subr.mxu0 0.0
        %503 = vmatpush1.xpose.msra.mxu0 0.0
        %504 = vmatprep.subr.mxu0 0.0
        %v505 = vand.u32 %v172, 4294901760
        %v506 = vsub.f32 %v172, %v505
        %v507 = vand.u32 %v506, 4294901760
        %508 = vmatpush1.xpose.msra.mxu0 %v507
        %509 = vmatprep.subr.mxu0 0.0
        %510 = vmatpush2.xpose.msra.mxu0 0.0
        %511 = vmatprep.subr.mxu0 0.0
        %512 = vmatpush2.xpose.msra.mxu0 0.0
        %513 = vmatprep.subr.mxu0 0.0
        %514 = vmatpush2.xpose.msra.mxu0 0.0
        %515 = vmatprep.subr.mxu0 0.0
        %516 = vmatpush2.xpose.msra.mxu0 0.0
        %517 = vmatprep.subr.mxu0 0.0
        %518 = vmatpush2.xpose.msra.mxu0 0.0
        %519 = vmatprep.subr.mxu0 0.0
        %520 = vmatpush2.xpose.msra.mxu0 0.0
        %521 = vmatprep.subr.mxu0 0.0
        %522 = vmatpush2.xpose.msra.mxu0 0.0
        %523 = vmatprep.subr.mxu0 0.0
        %524 = vmatpush2.xpose.msra.mxu0 0.0
        %525 = vmatprep.subr.mxu0 0.0
        %526 = vmatpush2.xpose.msra.mxu0 0.0
        %527 = vmatprep.subr.mxu0 0.0
        %528 = vmatpush2.xpose.msra.mxu0 0.0
        %529 = vmatprep.subr.mxu0 0.0
        %530 = vmatpush2.xpose.msra.mxu0 0.0
        %531 = vmatprep.subr.mxu0 0.0
        %532 = vmatpush2.xpose.msra.mxu0 0.0
        %533 = vmatprep.subr.mxu0 0.0
        %534 = vmatpush2.xpose.msra.mxu0 0.0
        %535 = vmatprep.subr.mxu0 0.0
        %536 = vmatpush2.xpose.msra.mxu0 0.0
        %537 = vmatprep.subr.mxu0 0.0
        %538 = vmatpush2.xpose.msra.mxu0 0.0
        %539 = vmatprep.subr.mxu0 0.0
        %540 = vmatpush2.xpose.msra.mxu0 0.0
        %541 = vmatprep.mubr.f32.mxu0 0.0
        %v542 = vand.u32 %v169, 4294901760
        %543 = vmatmul.mubr.f32.gmra.mxu0 %v542
        %v544 = vpop.f32.mrf.mxu0
        %v545 = vadd.f32 %v471, %v544
        %v546 = vpop.f32.mrf.mxu0
        %547 = vdwg.mxu0
        %548 = vmatprep.subr.mxu0 0.0
        %549 = vmatpush1.xpose.msra.mxu0 0.0
        %550 = vmatprep.subr.mxu0 0.0
        %551 = vmatpush1.xpose.msra.mxu0 0.0
        %552 = vmatprep.subr.mxu0 0.0
        %553 = vmatpush1.xpose.msra.mxu0 0.0
        %554 = vmatprep.subr.mxu0 0.0
        %555 = vmatpush1.xpose.msra.mxu0 0.0
        %556 = vmatprep.subr.mxu0 0.0
        %557 = vmatpush1.xpose.msra.mxu0 0.0
        %558 = vmatprep.subr.mxu0 0.0
        %559 = vmatpush1.xpose.msra.mxu0 0.0
        %560 = vmatprep.subr.mxu0 0.0
        %561 = vmatpush1.xpose.msra.mxu0 0.0
        %562 = vmatprep.subr.mxu0 0.0
        %563 = vmatpush1.xpose.msra.mxu0 0.0
        %564 = vmatprep.subr.mxu0 0.0
        %565 = vmatpush1.xpose.msra.mxu0 0.0
        %566 = vmatprep.subr.mxu0 0.0
        %567 = vmatpush1.xpose.msra.mxu0 0.0
        %568 = vmatprep.subr.mxu0 0.0
        %569 = vmatpush1.xpose.msra.mxu0 0.0
        %570 = vmatprep.subr.mxu0 0.0
        %571 = vmatpush1.xpose.msra.mxu0 0.0
        %572 = vmatprep.subr.mxu0 0.0
        %573 = vmatpush1.xpose.msra.mxu0 0.0
        %574 = vmatprep.subr.mxu0 0.0
        %575 = vmatpush1.xpose.msra.mxu0 0.0
        %576 = vmatprep.subr.mxu0 0.0
        %577 = vmatpush1.xpose.msra.mxu0 0.0
        %578 = vmatprep.subr.mxu0 0.0
        %v579 = vand.u32 %v172, 4294901760
        %580 = vmatpush1.xpose.msra.mxu0 %v579
        %581 = vmatprep.subr.mxu0 0.0
        %582 = vmatpush2.xpose.msra.mxu0 0.0
        %583 = vmatprep.subr.mxu0 0.0
        %584 = vmatpush2.xpose.msra.mxu0 0.0
        %585 = vmatprep.subr.mxu0 0.0
        %586 = vmatpush2.xpose.msra.mxu0 0.0
        %587 = vmatprep.subr.mxu0 0.0
        %588 = vmatpush2.xpose.msra.mxu0 0.0
        %589 = vmatprep.subr.mxu0 0.0
        %590 = vmatpush2.xpose.msra.mxu0 0.0
        %591 = vmatprep.subr.mxu0 0.0
        %592 = vmatpush2.xpose.msra.mxu0 0.0
        %593 = vmatprep.subr.mxu0 0.0
        %594 = vmatpush2.xpose.msra.mxu0 0.0
        %595 = vmatprep.subr.mxu0 0.0
        %596 = vmatpush2.xpose.msra.mxu0 0.0
        %597 = vmatprep.subr.mxu0 0.0
        %598 = vmatpush2.xpose.msra.mxu0 0.0
        %599 = vmatprep.subr.mxu0 0.0
        %600 = vmatpush2.xpose.msra.mxu0 0.0
        %601 = vmatprep.subr.mxu0 0.0
        %602 = vmatpush2.xpose.msra.mxu0 0.0
        %603 = vmatprep.subr.mxu0 0.0
        %604 = vmatpush2.xpose.msra.mxu0 0.0
        %605 = vmatprep.subr.mxu0 0.0
        %606 = vmatpush2.xpose.msra.mxu0 0.0
        %607 = vmatprep.subr.mxu0 0.0
        %608 = vmatpush2.xpose.msra.mxu0 0.0
        %609 = vmatprep.subr.mxu0 0.0
        %610 = vmatpush2.xpose.msra.mxu0 0.0
        %611 = vmatprep.subr.mxu0 0.0
        %612 = vmatpush2.xpose.msra.mxu0 0.0
        %613 = vmatprep.mubr.f32.mxu0 0.0
        %v614 = vand.u32 %v169, 4294901760
        %615 = vmatmul.mubr.f32.gmra.mxu0 %v614
        %v616 = vpop.f32.mrf.mxu0
        %v617 = vadd.f32 %v545, %v616
        %v618 = vpop.f32.mrf.mxu0
        %619 = vdwg.mxu0
        %v621 = vsel %vm167, %v158, 0
        %623 = vmatprep.subr.mxu0 0.0
        %624 = vmatpush1.xpose.msra.mxu0 0.0
        %625 = vmatprep.subr.mxu0 0.0
        %626 = vmatpush1.xpose.msra.mxu0 0.0
        %627 = vmatprep.subr.mxu0 0.0
        %628 = vmatpush1.xpose.msra.mxu0 0.0
        %629 = vmatprep.subr.mxu0 0.0
        %630 = vmatpush1.xpose.msra.mxu0 0.0
        %631 = vmatprep.subr.mxu0 0.0
        %632 = vmatpush1.xpose.msra.mxu0 0.0
        %633 = vmatprep.subr.mxu0 0.0
        %634 = vmatpush1.xpose.msra.mxu0 0.0
        %635 = vmatprep.subr.mxu0 0.0
        %636 = vmatpush1.xpose.msra.mxu0 0.0
        %637 = vmatprep.subr.mxu0 0.0
        %638 = vmatpush1.xpose.msra.mxu0 0.0
        %639 = vmatprep.subr.mxu0 0.0
        %640 = vmatpush1.xpose.msra.mxu0 0.0
        %641 = vmatprep.subr.mxu0 0.0
        %642 = vmatpush1.xpose.msra.mxu0 0.0
        %643 = vmatprep.subr.mxu0 0.0
        %644 = vmatpush1.xpose.msra.mxu0 0.0
        %645 = vmatprep.subr.mxu0 0.0
        %646 = vmatpush1.xpose.msra.mxu0 0.0
        %647 = vmatprep.subr.mxu0 0.0
        %648 = vmatpush1.xpose.msra.mxu0 0.0
        %649 = vmatprep.subr.mxu0 0.0
        %650 = vmatpush1.xpose.msra.mxu0 0.0
        %651 = vmatprep.subr.mxu0 0.0
        %652 = vmatpush1.xpose.msra.mxu0 0.0
        %653 = vmatprep.subr.mxu0 0.0
        %v654 = vand.u32 %v172, 4294901760
        %655 = vmatpush1.xpose.msra.mxu0 %v654
        %656 = vmatprep.subr.mxu0 0.0
        %657 = vmatpush2.xpose.msra.mxu0 0.0
        %658 = vmatprep.subr.mxu0 0.0
        %659 = vmatpush2.xpose.msra.mxu0 0.0
        %660 = vmatprep.subr.mxu0 0.0
        %661 = vmatpush2.xpose.msra.mxu0 0.0
        %662 = vmatprep.subr.mxu0 0.0
        %663 = vmatpush2.xpose.msra.mxu0 0.0
        %664 = vmatprep.subr.mxu0 0.0
        %665 = vmatpush2.xpose.msra.mxu0 0.0
        %666 = vmatprep.subr.mxu0 0.0
        %667 = vmatpush2.xpose.msra.mxu0 0.0
        %668 = vmatprep.subr.mxu0 0.0
        %669 = vmatpush2.xpose.msra.mxu0 0.0
        %670 = vmatprep.subr.mxu0 0.0
        %671 = vmatpush2.xpose.msra.mxu0 0.0
        %672 = vmatprep.subr.mxu0 0.0
        %673 = vmatpush2.xpose.msra.mxu0 0.0
        %674 = vmatprep.subr.mxu0 0.0
        %675 = vmatpush2.xpose.msra.mxu0 0.0
        %676 = vmatprep.subr.mxu0 0.0
        %677 = vmatpush2.xpose.msra.mxu0 0.0
        %678 = vmatprep.subr.mxu0 0.0
        %679 = vmatpush2.xpose.msra.mxu0 0.0
        %680 = vmatprep.subr.mxu0 0.0
        %681 = vmatpush2.xpose.msra.mxu0 0.0
        %682 = vmatprep.subr.mxu0 0.0
        %683 = vmatpush2.xpose.msra.mxu0 0.0
        %684 = vmatprep.subr.mxu0 0.0
        %685 = vmatpush2.xpose.msra.mxu0 0.0
        %686 = vmatprep.subr.mxu0 0.0
        %687 = vmatpush2.xpose.msra.mxu0 0.0
        %688 = vmatprep.mubr.f32.mxu0 0.0
        %v689 = vand.u32 %v621, 4294901760
        %v690 = vsub.f32 %v621, %v689
        %v691 = vand.u32 %v690, 4294901760
        %v692 = vsub.f32 %v690, %v691
        %v693 = vand.u32 %v692, 4294901760
        %694 = vmatmul.mubr.f32.gmra.mxu0 %v693
        %v695 = vpop.f32.mrf.mxu0
        %v696 = vadd.f32 0.0, %v695
        %v697 = vpop.f32.mrf.mxu0
        %698 = vdwg.mxu0
        %699 = vmatprep.subr.mxu0 0.0
        %700 = vmatpush1.xpose.msra.mxu0 0.0
        %701 = vmatprep.subr.mxu0 0.0
        %702 = vmatpush1.xpose.msra.mxu0 0.0
        %703 = vmatprep.subr.mxu0 0.0
        %704 = vmatpush1.xpose.msra.mxu0 0.0
        %705 = vmatprep.subr.mxu0 0.0
        %706 = vmatpush1.xpose.msra.mxu0 0.0
        %707 = vmatprep.subr.mxu0 0.0
        %708 = vmatpush1.xpose.msra.mxu0 0.0
        %709 = vmatprep.subr.mxu0 0.0
        %710 = vmatpush1.xpose.msra.mxu0 0.0
        %711 = vmatprep.subr.mxu0 0.0
        %712 = vmatpush1.xpose.msra.mxu0 0.0
        %713 = vmatprep.subr.mxu0 0.0
        %714 = vmatpush1.xpose.msra.mxu0 0.0
        %715 = vmatprep.subr.mxu0 0.0
        %716 = vmatpush1.xpose.msra.mxu0 0.0
        %717 = vmatprep.subr.mxu0 0.0
        %718 = vmatpush1.xpose.msra.mxu0 0.0
        %719 = vmatprep.subr.mxu0 0.0
        %720 = vmatpush1.xpose.msra.mxu0 0.0
        %721 = vmatprep.subr.mxu0 0.0
        %722 = vmatpush1.xpose.msra.mxu0 0.0
        %723 = vmatprep.subr.mxu0 0.0
        %724 = vmatpush1.xpose.msra.mxu0 0.0
        %725 = vmatprep.subr.mxu0 0.0
        %726 = vmatpush1.xpose.msra.mxu0 0.0
        %727 = vmatprep.subr.mxu0 0.0
        %728 = vmatpush1.xpose.msra.mxu0 0.0
        %729 = vmatprep.subr.mxu0 0.0
        %v730 = vand.u32 %v172, 4294901760
        %v731 = vsub.f32 %v172, %v730
        %v732 = vand.u32 %v731, 4294901760
        %v733 = vsub.f32 %v731, %v732
        %v734 = vand.u32 %v733, 4294901760
        %735 = vmatpush1.xpose.msra.mxu0 %v734
        %736 = vmatprep.subr.mxu0 0.0
        %737 = vmatpush2.xpose.msra.mxu0 0.0
        %738 = vmatprep.subr.mxu0 0.0
        %739 = vmatpush2.xpose.msra.mxu0 0.0
        %740 = vmatprep.subr.mxu0 0.0
        %741 = vmatpush2.xpose.msra.mxu0 0.0
        %742 = vmatprep.subr.mxu0 0.0
        %743 = vmatpush2.xpose.msra.mxu0 0.0
        %744 = vmatprep.subr.mxu0 0.0
        %745 = vmatpush2.xpose.msra.mxu0 0.0
        %746 = vmatprep.subr.mxu0 0.0
        %747 = vmatpush2.xpose.msra.mxu0 0.0
        %748 = vmatprep.subr.mxu0 0.0
        %749 = vmatpush2.xpose.msra.mxu0 0.0
        %750 = vmatprep.subr.mxu0 0.0
        %751 = vmatpush2.xpose.msra.mxu0 0.0
        %752 = vmatprep.subr.mxu0 0.0
        %753 = vmatpush2.xpose.msra.mxu0 0.0
        %754 = vmatprep.subr.mxu0 0.0
        %755 = vmatpush2.xpose.msra.mxu0 0.0
        %756 = vmatprep.subr.mxu0 0.0
        %757 = vmatpush2.xpose.msra.mxu0 0.0
        %758 = vmatprep.subr.mxu0 0.0
        %759 = vmatpush2.xpose.msra.mxu0 0.0
        %760 = vmatprep.subr.mxu0 0.0
        %761 = vmatpush2.xpose.msra.mxu0 0.0
        %762 = vmatprep.subr.mxu0 0.0
        %763 = vmatpush2.xpose.msra.mxu0 0.0
        %764 = vmatprep.subr.mxu0 0.0
        %765 = vmatpush2.xpose.msra.mxu0 0.0
        %766 = vmatprep.subr.mxu0 0.0
        %767 = vmatpush2.xpose.msra.mxu0 0.0
        %768 = vmatprep.mubr.f32.mxu0 0.0
        %v769 = vand.u32 %v621, 4294901760
        %770 = vmatmul.mubr.f32.gmra.mxu0 %v769
        %v771 = vpop.f32.mrf.mxu0
        %v772 = vadd.f32 %v696, %v771
        %v773 = vpop.f32.mrf.mxu0
        %774 = vdwg.mxu0
        %775 = vmatprep.subr.mxu0 0.0
        %776 = vmatpush1.xpose.msra.mxu0 0.0
        %777 = vmatprep.subr.mxu0 0.0
        %778 = vmatpush1.xpose.msra.mxu0 0.0
        %779 = vmatprep.subr.mxu0 0.0
        %780 = vmatpush1.xpose.msra.mxu0 0.0
        %781 = vmatprep.subr.mxu0 0.0
        %782 = vmatpush1.xpose.msra.mxu0 0.0
        %783 = vmatprep.subr.mxu0 0.0
        %784 = vmatpush1.xpose.msra.mxu0 0.0
        %785 = vmatprep.subr.mxu0 0.0
        %786 = vmatpush1.xpose.msra.mxu0 0.0
        %787 = vmatprep.subr.mxu0 0.0
        %788 = vmatpush1.xpose.msra.mxu0 0.0
        %789 = vmatprep.subr.mxu0 0.0
        %790 = vmatpush1.xpose.msra.mxu0 0.0
        %791 = vmatprep.subr.mxu0 0.0
        %792 = vmatpush1.xpose.msra.mxu0 0.0
        %793 = vmatprep.subr.mxu0 0.0
        %794 = vmatpush1.xpose.msra.mxu0 0.0
        %795 = vmatprep.subr.mxu0 0.0
        %796 = vmatpush1.xpose.msra.mxu0 0.0
        %797 = vmatprep.subr.mxu0 0.0
        %798 = vmatpush1.xpose.msra.mxu0 0.0
        %799 = vmatprep.subr.mxu0 0.0
        %800 = vmatpush1.xpose.msra.mxu0 0.0
        %801 = vmatprep.subr.mxu0 0.0
        %802 = vmatpush1.xpose.msra.mxu0 0.0
        %803 = vmatprep.subr.mxu0 0.0
        %804 = vmatpush1.xpose.msra.mxu0 0.0
        %805 = vmatprep.subr.mxu0 0.0
        %v806 = vand.u32 %v172, 4294901760
        %v807 = vsub.f32 %v172, %v806
        %808 = vmatpush1.xpose.msra.mxu0 %v807
        %809 = vmatprep.subr.mxu0 0.0
        %810 = vmatpush2.xpose.msra.mxu0 0.0
        %811 = vmatprep.subr.mxu0 0.0
        %812 = vmatpush2.xpose.msra.mxu0 0.0
        %813 = vmatprep.subr.mxu0 0.0
        %814 = vmatpush2.xpose.msra.mxu0 0.0
        %815 = vmatprep.subr.mxu0 0.0
        %816 = vmatpush2.xpose.msra.mxu0 0.0
        %817 = vmatprep.subr.mxu0 0.0
        %818 = vmatpush2.xpose.msra.mxu0 0.0
        %819 = vmatprep.subr.mxu0 0.0
        %820 = vmatpush2.xpose.msra.mxu0 0.0
        %821 = vmatprep.subr.mxu0 0.0
        %822 = vmatpush2.xpose.msra.mxu0 0.0
        %823 = vmatprep.subr.mxu0 0.0
        %824 = vmatpush2.xpose.msra.mxu0 0.0
        %825 = vmatprep.subr.mxu0 0.0
        %826 = vmatpush2.xpose.msra.mxu0 0.0
        %827 = vmatprep.subr.mxu0 0.0
        %828 = vmatpush2.xpose.msra.mxu0 0.0
        %829 = vmatprep.subr.mxu0 0.0
        %830 = vmatpush2.xpose.msra.mxu0 0.0
        %831 = vmatprep.subr.mxu0 0.0
        %832 = vmatpush2.xpose.msra.mxu0 0.0
        %833 = vmatprep.subr.mxu0 0.0
        %834 = vmatpush2.xpose.msra.mxu0 0.0
        %835 = vmatprep.subr.mxu0 0.0
        %836 = vmatpush2.xpose.msra.mxu0 0.0
        %837 = vmatprep.subr.mxu0 0.0
        %838 = vmatpush2.xpose.msra.mxu0 0.0
        %839 = vmatprep.subr.mxu0 0.0
        %840 = vmatpush2.xpose.msra.mxu0 0.0
        %841 = vmatprep.mubr.f32.mxu0 0.0
        %v842 = vand.u32 %v621, 4294901760
        %v843 = vsub.f32 %v621, %v842
        %844 = vmatmul.mubr.f32.gmra.mxu0 %v843
        %v845 = vpop.f32.mrf.mxu0
        %v846 = vadd.f32 %v772, %v845
        %v847 = vpop.f32.mrf.mxu0
        %848 = vdwg.mxu0
        %849 = vmatprep.subr.mxu0 0.0
        %850 = vmatpush1.xpose.msra.mxu0 0.0
        %851 = vmatprep.subr.mxu0 0.0
        %852 = vmatpush1.xpose.msra.mxu0 0.0
        %853 = vmatprep.subr.mxu0 0.0
        %854 = vmatpush1.xpose.msra.mxu0 0.0
        %855 = vmatprep.subr.mxu0 0.0
        %856 = vmatpush1.xpose.msra.mxu0 0.0
        %857 = vmatprep.subr.mxu0 0.0
        %858 = vmatpush1.xpose.msra.mxu0 0.0
        %859 = vmatprep.subr.mxu0 0.0
        %860 = vmatpush1.xpose.msra.mxu0 0.0
        %861 = vmatprep.subr.mxu0 0.0
        %862 = vmatpush1.xpose.msra.mxu0 0.0
        %863 = vmatprep.subr.mxu0 0.0
        %864 = vmatpush1.xpose.msra.mxu0 0.0
        %865 = vmatprep.subr.mxu0 0.0
        %866 = vmatpush1.xpose.msra.mxu0 0.0
        %867 = vmatprep.subr.mxu0 0.0
        %868 = vmatpush1.xpose.msra.mxu0 0.0
        %869 = vmatprep.subr.mxu0 0.0
        %870 = vmatpush1.xpose.msra.mxu0 0.0
        %871 = vmatprep.subr.mxu0 0.0
        %872 = vmatpush1.xpose.msra.mxu0 0.0
        %873 = vmatprep.subr.mxu0 0.0
        %874 = vmatpush1.xpose.msra.mxu0 0.0
        %875 = vmatprep.subr.mxu0 0.0
        %876 = vmatpush1.xpose.msra.mxu0 0.0
        %877 = vmatprep.subr.mxu0 0.0
        %878 = vmatpush1.xpose.msra.mxu0 0.0
        %879 = vmatprep.subr.mxu0 0.0
        %v880 = vand.u32 %v172, 4294901760
        %881 = vmatpush1.xpose.msra.mxu0 %v880
        %882 = vmatprep.subr.mxu0 0.0
        %883 = vmatpush2.xpose.msra.mxu0 0.0
        %884 = vmatprep.subr.mxu0 0.0
        %885 = vmatpush2.xpose.msra.mxu0 0.0
        %886 = vmatprep.subr.mxu0 0.0
        %887 = vmatpush2.xpose.msra.mxu0 0.0
        %888 = vmatprep.subr.mxu0 0.0
        %889 = vmatpush2.xpose.msra.mxu0 0.0
        %890 = vmatprep.subr.mxu0 0.0
        %891 = vmatpush2.xpose.msra.mxu0 0.0
        %892 = vmatprep.subr.mxu0 0.0
        %893 = vmatpush2.xpose.msra.mxu0 0.0
        %894 = vmatprep.subr.mxu0 0.0
        %895 = vmatpush2.xpose.msra.mxu0 0.0
        %896 = vmatprep.subr.mxu0 0.0
        %897 = vmatpush2.xpose.msra.mxu0 0.0
        %898 = vmatprep.subr.mxu0 0.0
        %899 = vmatpush2.xpose.msra.mxu0 0.0
        %900 = vmatprep.subr.mxu0 0.0
        %901 = vmatpush2.xpose.msra.mxu0 0.0
        %902 = vmatprep.subr.mxu0 0.0
        %903 = vmatpush2.xpose.msra.mxu0 0.0
        %904 = vmatprep.subr.mxu0 0.0
        %905 = vmatpush2.xpose.msra.mxu0 0.0
        %906 = vmatprep.subr.mxu0 0.0
        %907 = vmatpush2.xpose.msra.mxu0 0.0
        %908 = vmatprep.subr.mxu0 0.0
        %909 = vmatpush2.xpose.msra.mxu0 0.0
        %910 = vmatprep.subr.mxu0 0.0
        %911 = vmatpush2.xpose.msra.mxu0 0.0
        %912 = vmatprep.subr.mxu0 0.0
        %913 = vmatpush2.xpose.msra.mxu0 0.0
        %914 = vmatprep.mubr.f32.mxu0 0.0
        %v915 = vand.u32 %v621, 4294901760
        %v916 = vsub.f32 %v621, %v915
        %v917 = vand.u32 %v916, 4294901760
        %918 = vmatmul.mubr.f32.gmra.mxu0 %v917
        %v919 = vpop.f32.mrf.mxu0
        %v920 = vadd.f32 %v846, %v919
        %v921 = vpop.f32.mrf.mxu0
        %922 = vdwg.mxu0
        %923 = vmatprep.subr.mxu0 0.0
        %924 = vmatpush1.xpose.msra.mxu0 0.0
        %925 = vmatprep.subr.mxu0 0.0
        %926 = vmatpush1.xpose.msra.mxu0 0.0
        %927 = vmatprep.subr.mxu0 0.0
        %928 = vmatpush1.xpose.msra.mxu0 0.0
        %929 = vmatprep.subr.mxu0 0.0
        %930 = vmatpush1.xpose.msra.mxu0 0.0
        %931 = vmatprep.subr.mxu0 0.0
        %932 = vmatpush1.xpose.msra.mxu0 0.0
        %933 = vmatprep.subr.mxu0 0.0
        %934 = vmatpush1.xpose.msra.mxu0 0.0
        %935 = vmatprep.subr.mxu0 0.0
        %936 = vmatpush1.xpose.msra.mxu0 0.0
        %937 = vmatprep.subr.mxu0 0.0
        %938 = vmatpush1.xpose.msra.mxu0 0.0
        %939 = vmatprep.subr.mxu0 0.0
        %940 = vmatpush1.xpose.msra.mxu0 0.0
        %941 = vmatprep.subr.mxu0 0.0
        %942 = vmatpush1.xpose.msra.mxu0 0.0
        %943 = vmatprep.subr.mxu0 0.0
        %944 = vmatpush1.xpose.msra.mxu0 0.0
        %945 = vmatprep.subr.mxu0 0.0
        %946 = vmatpush1.xpose.msra.mxu0 0.0
        %947 = vmatprep.subr.mxu0 0.0
        %948 = vmatpush1.xpose.msra.mxu0 0.0
        %949 = vmatprep.subr.mxu0 0.0
        %950 = vmatpush1.xpose.msra.mxu0 0.0
        %951 = vmatprep.subr.mxu0 0.0
        %952 = vmatpush1.xpose.msra.mxu0 0.0
        %953 = vmatprep.subr.mxu0 0.0
        %v954 = vand.u32 %v172, 4294901760
        %v955 = vsub.f32 %v172, %v954
        %v956 = vand.u32 %v955, 4294901760
        %957 = vmatpush1.xpose.msra.mxu0 %v956
        %958 = vmatprep.subr.mxu0 0.0
        %959 = vmatpush2.xpose.msra.mxu0 0.0
        %960 = vmatprep.subr.mxu0 0.0
        %961 = vmatpush2.xpose.msra.mxu0 0.0
        %962 = vmatprep.subr.mxu0 0.0
        %963 = vmatpush2.xpose.msra.mxu0 0.0
        %964 = vmatprep.subr.mxu0 0.0
        %965 = vmatpush2.xpose.msra.mxu0 0.0
        %966 = vmatprep.subr.mxu0 0.0
        %967 = vmatpush2.xpose.msra.mxu0 0.0
        %968 = vmatprep.subr.mxu0 0.0
        %969 = vmatpush2.xpose.msra.mxu0 0.0
        %970 = vmatprep.subr.mxu0 0.0
        %971 = vmatpush2.xpose.msra.mxu0 0.0
        %972 = vmatprep.subr.mxu0 0.0
        %973 = vmatpush2.xpose.msra.mxu0 0.0
        %974 = vmatprep.subr.mxu0 0.0
        %975 = vmatpush2.xpose.msra.mxu0 0.0
        %976 = vmatprep.subr.mxu0 0.0
        %977 = vmatpush2.xpose.msra.mxu0 0.0
        %978 = vmatprep.subr.mxu0 0.0
        %979 = vmatpush2.xpose.msra.mxu0 0.0
        %980 = vmatprep.subr.mxu0 0.0
        %981 = vmatpush2.xpose.msra.mxu0 0.0
        %982 = vmatprep.subr.mxu0 0.0
        %983 = vmatpush2.xpose.msra.mxu0 0.0
        %984 = vmatprep.subr.mxu0 0.0
        %985 = vmatpush2.xpose.msra.mxu0 0.0
        %986 = vmatprep.subr.mxu0 0.0
        %987 = vmatpush2.xpose.msra.mxu0 0.0
        %988 = vmatprep.subr.mxu0 0.0
        %989 = vmatpush2.xpose.msra.mxu0 0.0
        %990 = vmatprep.mubr.f32.mxu0 0.0
        %v991 = vand.u32 %v621, 4294901760
        %992 = vmatmul.mubr.f32.gmra.mxu0 %v991
        %v993 = vpop.f32.mrf.mxu0
        %v994 = vadd.f32 %v920, %v993
        %v995 = vpop.f32.mrf.mxu0
        %996 = vdwg.mxu0
        %997 = vmatprep.subr.mxu0 0.0
        %998 = vmatpush1.xpose.msra.mxu0 0.0
        %999 = vmatprep.subr.mxu0 0.0
        %1000 = vmatpush1.xpose.msra.mxu0 0.0
        %1001 = vmatprep.subr.mxu0 0.0
        %1002 = vmatpush1.xpose.msra.mxu0 0.0
        %1003 = vmatprep.subr.mxu0 0.0
        %1004 = vmatpush1.xpose.msra.mxu0 0.0
        %1005 = vmatprep.subr.mxu0 0.0
        %1006 = vmatpush1.xpose.msra.mxu0 0.0
        %1007 = vmatprep.subr.mxu0 0.0
        %1008 = vmatpush1.xpose.msra.mxu0 0.0
        %1009 = vmatprep.subr.mxu0 0.0
        %1010 = vmatpush1.xpose.msra.mxu0 0.0
        %1011 = vmatprep.subr.mxu0 0.0
        %1012 = vmatpush1.xpose.msra.mxu0 0.0
        %1013 = vmatprep.subr.mxu0 0.0
        %1014 = vmatpush1.xpose.msra.mxu0 0.0
        %1015 = vmatprep.subr.mxu0 0.0
        %1016 = vmatpush1.xpose.msra.mxu0 0.0
        %1017 = vmatprep.subr.mxu0 0.0
        %1018 = vmatpush1.xpose.msra.mxu0 0.0
        %1019 = vmatprep.subr.mxu0 0.0
        %1020 = vmatpush1.xpose.msra.mxu0 0.0
        %1021 = vmatprep.subr.mxu0 0.0
        %1022 = vmatpush1.xpose.msra.mxu0 0.0
        %1023 = vmatprep.subr.mxu0 0.0
        %1024 = vmatpush1.xpose.msra.mxu0 0.0
        %1025 = vmatprep.subr.mxu0 0.0
        %1026 = vmatpush1.xpose.msra.mxu0 0.0
        %1027 = vmatprep.subr.mxu0 0.0
        %v1028 = vand.u32 %v172, 4294901760
        %1029 = vmatpush1.xpose.msra.mxu0 %v1028
        %1030 = vmatprep.subr.mxu0 0.0
        %1031 = vmatpush2.xpose.msra.mxu0 0.0
        %1032 = vmatprep.subr.mxu0 0.0
        %1033 = vmatpush2.xpose.msra.mxu0 0.0
        %1034 = vmatprep.subr.mxu0 0.0
        %1035 = vmatpush2.xpose.msra.mxu0 0.0
        %1036 = vmatprep.subr.mxu0 0.0
        %1037 = vmatpush2.xpose.msra.mxu0 0.0
        %1038 = vmatprep.subr.mxu0 0.0
        %1039 = vmatpush2.xpose.msra.mxu0 0.0
        %1040 = vmatprep.subr.mxu0 0.0
        %1041 = vmatpush2.xpose.msra.mxu0 0.0
        %1042 = vmatprep.subr.mxu0 0.0
        %1043 = vmatpush2.xpose.msra.mxu0 0.0
        %1044 = vmatprep.subr.mxu0 0.0
        %1045 = vmatpush2.xpose.msra.mxu0 0.0
        %1046 = vmatprep.subr.mxu0 0.0
        %1047 = vmatpush2.xpose.msra.mxu0 0.0
        %1048 = vmatprep.subr.mxu0 0.0
        %1049 = vmatpush2.xpose.msra.mxu0 0.0
        %1050 = vmatprep.subr.mxu0 0.0
        %1051 = vmatpush2.xpose.msra.mxu0 0.0
        %1052 = vmatprep.subr.mxu0 0.0
        %1053 = vmatpush2.xpose.msra.mxu0 0.0
        %1054 = vmatprep.subr.mxu0 0.0
        %1055 = vmatpush2.xpose.msra.mxu0 0.0
        %1056 = vmatprep.subr.mxu0 0.0
        %1057 = vmatpush2.xpose.msra.mxu0 0.0
        %1058 = vmatprep.subr.mxu0 0.0
        %1059 = vmatpush2.xpose.msra.mxu0 0.0
        %1060 = vmatprep.subr.mxu0 0.0
        %1061 = vmatpush2.xpose.msra.mxu0 0.0
        %1062 = vmatprep.mubr.f32.mxu0 0.0
        %v1063 = vand.u32 %v621, 4294901760
        %1064 = vmatmul.mubr.f32.gmra.mxu0 %v1063
        %v1065 = vpop.f32.mrf.mxu0
        %v1066 = vadd.f32 %v994, %v1065
        %v1067 = vpop.f32.mrf.mxu0
        %1068 = vdwg.mxu0
        %v1070 = vsel %vm167, %v159, 0
        %1072 = vmatprep.subr.mxu0 0.0
        %1073 = vmatpush1.xpose.msra.mxu0 0.0
        %1074 = vmatprep.subr.mxu0 0.0
        %1075 = vmatpush1.xpose.msra.mxu0 0.0
        %1076 = vmatprep.subr.mxu0 0.0
        %1077 = vmatpush1.xpose.msra.mxu0 0.0
        %1078 = vmatprep.subr.mxu0 0.0
        %1079 = vmatpush1.xpose.msra.mxu0 0.0
        %1080 = vmatprep.subr.mxu0 0.0
        %1081 = vmatpush1.xpose.msra.mxu0 0.0
        %1082 = vmatprep.subr.mxu0 0.0
        %1083 = vmatpush1.xpose.msra.mxu0 0.0
        %1084 = vmatprep.subr.mxu0 0.0
        %1085 = vmatpush1.xpose.msra.mxu0 0.0
        %1086 = vmatprep.subr.mxu0 0.0
        %1087 = vmatpush1.xpose.msra.mxu0 0.0
        %1088 = vmatprep.subr.mxu0 0.0
        %1089 = vmatpush1.xpose.msra.mxu0 0.0
        %1090 = vmatprep.subr.mxu0 0.0
        %1091 = vmatpush1.xpose.msra.mxu0 0.0
        %1092 = vmatprep.subr.mxu0 0.0
        %1093 = vmatpush1.xpose.msra.mxu0 0.0
        %1094 = vmatprep.subr.mxu0 0.0
        %1095 = vmatpush1.xpose.msra.mxu0 0.0
        %1096 = vmatprep.subr.mxu0 0.0
        %1097 = vmatpush1.xpose.msra.mxu0 0.0
        %1098 = vmatprep.subr.mxu0 0.0
        %1099 = vmatpush1.xpose.msra.mxu0 0.0
        %1100 = vmatprep.subr.mxu0 0.0
        %1101 = vmatpush1.xpose.msra.mxu0 0.0
        %1102 = vmatprep.subr.mxu0 0.0
        %v1103 = vand.u32 %v172, 4294901760
        %1104 = vmatpush1.xpose.msra.mxu0 %v1103
        %1105 = vmatprep.subr.mxu0 0.0
        %1106 = vmatpush2.xpose.msra.mxu0 0.0
        %1107 = vmatprep.subr.mxu0 0.0
        %1108 = vmatpush2.xpose.msra.mxu0 0.0
        %1109 = vmatprep.subr.mxu0 0.0
        %1110 = vmatpush2.xpose.msra.mxu0 0.0
        %1111 = vmatprep.subr.mxu0 0.0
        %1112 = vmatpush2.xpose.msra.mxu0 0.0
        %1113 = vmatprep.subr.mxu0 0.0
        %1114 = vmatpush2.xpose.msra.mxu0 0.0
        %1115 = vmatprep.subr.mxu0 0.0
        %1116 = vmatpush2.xpose.msra.mxu0 0.0
        %1117 = vmatprep.subr.mxu0 0.0
        %1118 = vmatpush2.xpose.msra.mxu0 0.0
        %1119 = vmatprep.subr.mxu0 0.0
        %1120 = vmatpush2.xpose.msra.mxu0 0.0
        %1121 = vmatprep.subr.mxu0 0.0
        %1122 = vmatpush2.xpose.msra.mxu0 0.0
        %1123 = vmatprep.subr.mxu0 0.0
        %1124 = vmatpush2.xpose.msra.mxu0 0.0
        %1125 = vmatprep.subr.mxu0 0.0
        %1126 = vmatpush2.xpose.msra.mxu0 0.0
        %1127 = vmatprep.subr.mxu0 0.0
        %1128 = vmatpush2.xpose.msra.mxu0 0.0
        %1129 = vmatprep.subr.mxu0 0.0
        %1130 = vmatpush2.xpose.msra.mxu0 0.0
        %1131 = vmatprep.subr.mxu0 0.0
        %1132 = vmatpush2.xpose.msra.mxu0 0.0
        %1133 = vmatprep.subr.mxu0 0.0
        %1134 = vmatpush2.xpose.msra.mxu0 0.0
        %1135 = vmatprep.subr.mxu0 0.0
        %1136 = vmatpush2.xpose.msra.mxu0 0.0
        %1137 = vmatprep.mubr.f32.mxu0 0.0
        %v1138 = vand.u32 %v1070, 4294901760
        %v1139 = vsub.f32 %v1070, %v1138
        %v1140 = vand.u32 %v1139, 4294901760
        %v1141 = vsub.f32 %v1139, %v1140
        %v1142 = vand.u32 %v1141, 4294901760
        %1143 = vmatmul.mubr.f32.gmra.mxu0 %v1142
        %v1144 = vpop.f32.mrf.mxu0
        %v1145 = vadd.f32 0.0, %v1144
        %v1146 = vpop.f32.mrf.mxu0
        %1147 = vdwg.mxu0
        %1148 = vmatprep.subr.mxu0 0.0
        %1149 = vmatpush1.xpose.msra.mxu0 0.0
        %1150 = vmatprep.subr.mxu0 0.0
        %1151 = vmatpush1.xpose.msra.mxu0 0.0
        %1152 = vmatprep.subr.mxu0 0.0
        %1153 = vmatpush1.xpose.msra.mxu0 0.0
        %1154 = vmatprep.subr.mxu0 0.0
        %1155 = vmatpush1.xpose.msra.mxu0 0.0
        %1156 = vmatprep.subr.mxu0 0.0
        %1157 = vmatpush1.xpose.msra.mxu0 0.0
        %1158 = vmatprep.subr.mxu0 0.0
        %1159 = vmatpush1.xpose.msra.mxu0 0.0
        %1160 = vmatprep.subr.mxu0 0.0
        %1161 = vmatpush1.xpose.msra.mxu0 0.0
        %1162 = vmatprep.subr.mxu0 0.0
        %1163 = vmatpush1.xpose.msra.mxu0 0.0
        %1164 = vmatprep.subr.mxu0 0.0
        %1165 = vmatpush1.xpose.msra.mxu0 0.0
        %1166 = vmatprep.subr.mxu0 0.0
        %1167 = vmatpush1.xpose.msra.mxu0 0.0
        %1168 = vmatprep.subr.mxu0 0.0
        %1169 = vmatpush1.xpose.msra.mxu0 0.0
        %1170 = vmatprep.subr.mxu0 0.0
        %1171 = vmatpush1.xpose.msra.mxu0 0.0
        %1172 = vmatprep.subr.mxu0 0.0
        %1173 = vmatpush1.xpose.msra.mxu0 0.0
        %1174 = vmatprep.subr.mxu0 0.0
        %1175 = vmatpush1.xpose.msra.mxu0 0.0
        %1176 = vmatprep.subr.mxu0 0.0
        %1177 = vmatpush1.xpose.msra.mxu0 0.0
        %1178 = vmatprep.subr.mxu0 0.0
        %v1179 = vand.u32 %v172, 4294901760
        %v1180 = vsub.f32 %v172, %v1179
        %v1181 = vand.u32 %v1180, 4294901760
        %v1182 = vsub.f32 %v1180, %v1181
        %v1183 = vand.u32 %v1182, 4294901760
        %1184 = vmatpush1.xpose.msra.mxu0 %v1183
        %1185 = vmatprep.subr.mxu0 0.0
        %1186 = vmatpush2.xpose.msra.mxu0 0.0
        %1187 = vmatprep.subr.mxu0 0.0
        %1188 = vmatpush2.xpose.msra.mxu0 0.0
        %1189 = vmatprep.subr.mxu0 0.0
        %1190 = vmatpush2.xpose.msra.mxu0 0.0
        %1191 = vmatprep.subr.mxu0 0.0
        %1192 = vmatpush2.xpose.msra.mxu0 0.0
        %1193 = vmatprep.subr.mxu0 0.0
        %1194 = vmatpush2.xpose.msra.mxu0 0.0
        %1195 = vmatprep.subr.mxu0 0.0
        %1196 = vmatpush2.xpose.msra.mxu0 0.0
        %1197 = vmatprep.subr.mxu0 0.0
        %1198 = vmatpush2.xpose.msra.mxu0 0.0
        %1199 = vmatprep.subr.mxu0 0.0
        %1200 = vmatpush2.xpose.msra.mxu0 0.0
        %1201 = vmatprep.subr.mxu0 0.0
        %1202 = vmatpush2.xpose.msra.mxu0 0.0
        %1203 = vmatprep.subr.mxu0 0.0
        %1204 = vmatpush2.xpose.msra.mxu0 0.0
        %1205 = vmatprep.subr.mxu0 0.0
        %1206 = vmatpush2.xpose.msra.mxu0 0.0
        %1207 = vmatprep.subr.mxu0 0.0
        %1208 = vmatpush2.xpose.msra.mxu0 0.0
        %1209 = vmatprep.subr.mxu0 0.0
        %1210 = vmatpush2.xpose.msra.mxu0 0.0
        %1211 = vmatprep.subr.mxu0 0.0
        %1212 = vmatpush2.xpose.msra.mxu0 0.0
        %1213 = vmatprep.subr.mxu0 0.0
        %1214 = vmatpush2.xpose.msra.mxu0 0.0
        %1215 = vmatprep.subr.mxu0 0.0
        %1216 = vmatpush2.xpose.msra.mxu0 0.0
        %1217 = vmatprep.mubr.f32.mxu0 0.0
        %v1218 = vand.u32 %v1070, 4294901760
        %1219 = vmatmul.mubr.f32.gmra.mxu0 %v1218
        %v1220 = vpop.f32.mrf.mxu0
        %v1221 = vadd.f32 %v1145, %v1220
        %v1222 = vpop.f32.mrf.mxu0
        %1223 = vdwg.mxu0
        %1224 = vmatprep.subr.mxu0 0.0
        %1225 = vmatpush1.xpose.msra.mxu0 0.0
        %1226 = vmatprep.subr.mxu0 0.0
        %1227 = vmatpush1.xpose.msra.mxu0 0.0
        %1228 = vmatprep.subr.mxu0 0.0
        %1229 = vmatpush1.xpose.msra.mxu0 0.0
        %1230 = vmatprep.subr.mxu0 0.0
        %1231 = vmatpush1.xpose.msra.mxu0 0.0
        %1232 = vmatprep.subr.mxu0 0.0
        %1233 = vmatpush1.xpose.msra.mxu0 0.0
        %1234 = vmatprep.subr.mxu0 0.0
        %1235 = vmatpush1.xpose.msra.mxu0 0.0
        %1236 = vmatprep.subr.mxu0 0.0
        %1237 = vmatpush1.xpose.msra.mxu0 0.0
        %1238 = vmatprep.subr.mxu0 0.0
        %1239 = vmatpush1.xpose.msra.mxu0 0.0
        %1240 = vmatprep.subr.mxu0 0.0
        %1241 = vmatpush1.xpose.msra.mxu0 0.0
        %1242 = vmatprep.subr.mxu0 0.0
        %1243 = vmatpush1.xpose.msra.mxu0 0.0
        %1244 = vmatprep.subr.mxu0 0.0
        %1245 = vmatpush1.xpose.msra.mxu0 0.0
        %1246 = vmatprep.subr.mxu0 0.0
        %1247 = vmatpush1.xpose.msra.mxu0 0.0
        %1248 = vmatprep.subr.mxu0 0.0
        %1249 = vmatpush1.xpose.msra.mxu0 0.0
        %1250 = vmatprep.subr.mxu0 0.0
        %1251 = vmatpush1.xpose.msra.mxu0 0.0
        %1252 = vmatprep.subr.mxu0 0.0
        %1253 = vmatpush1.xpose.msra.mxu0 0.0
        %1254 = vmatprep.subr.mxu0 0.0
        %v1255 = vand.u32 %v172, 4294901760
        %v1256 = vsub.f32 %v172, %v1255
        %1257 = vmatpush1.xpose.msra.mxu0 %v1256
        %1258 = vmatprep.subr.mxu0 0.0
        %1259 = vmatpush2.xpose.msra.mxu0 0.0
        %1260 = vmatprep.subr.mxu0 0.0
        %1261 = vmatpush2.xpose.msra.mxu0 0.0
        %1262 = vmatprep.subr.mxu0 0.0
        %1263 = vmatpush2.xpose.msra.mxu0 0.0
        %1264 = vmatprep.subr.mxu0 0.0
        %1265 = vmatpush2.xpose.msra.mxu0 0.0
        %1266 = vmatprep.subr.mxu0 0.0
        %1267 = vmatpush2.xpose.msra.mxu0 0.0
        %1268 = vmatprep.subr.mxu0 0.0
        %1269 = vmatpush2.xpose.msra.mxu0 0.0
        %1270 = vmatprep.subr.mxu0 0.0
        %1271 = vmatpush2.xpose.msra.mxu0 0.0
        %1272 = vmatprep.subr.mxu0 0.0
        %1273 = vmatpush2.xpose.msra.mxu0 0.0
        %1274 = vmatprep.subr.mxu0 0.0
        %1275 = vmatpush2.xpose.msra.mxu0 0.0
        %1276 = vmatprep.subr.mxu0 0.0
        %1277 = vmatpush2.xpose.msra.mxu0 0.0
        %1278 = vmatprep.subr.mxu0 0.0
        %1279 = vmatpush2.xpose.msra.mxu0 0.0
        %1280 = vmatprep.subr.mxu0 0.0
        %1281 = vmatpush2.xpose.msra.mxu0 0.0
        %1282 = vmatprep.subr.mxu0 0.0
        %1283 = vmatpush2.xpose.msra.mxu0 0.0
        %1284 = vmatprep.subr.mxu0 0.0
        %1285 = vmatpush2.xpose.msra.mxu0 0.0
        %1286 = vmatprep.subr.mxu0 0.0
        %1287 = vmatpush2.xpose.msra.mxu0 0.0
        %1288 = vmatprep.subr.mxu0 0.0
        %1289 = vmatpush2.xpose.msra.mxu0 0.0
        %1290 = vmatprep.mubr.f32.mxu0 0.0
        %v1291 = vand.u32 %v1070, 4294901760
        %v1292 = vsub.f32 %v1070, %v1291
        %1293 = vmatmul.mubr.f32.gmra.mxu0 %v1292
        %v1294 = vpop.f32.mrf.mxu0
        %v1295 = vadd.f32 %v1221, %v1294
        %v1296 = vpop.f32.mrf.mxu0
        %1297 = vdwg.mxu0
        %1298 = vmatprep.subr.mxu0 0.0
        %1299 = vmatpush1.xpose.msra.mxu0 0.0
        %1300 = vmatprep.subr.mxu0 0.0
        %1301 = vmatpush1.xpose.msra.mxu0 0.0
        %1302 = vmatprep.subr.mxu0 0.0
        %1303 = vmatpush1.xpose.msra.mxu0 0.0
        %1304 = vmatprep.subr.mxu0 0.0
        %1305 = vmatpush1.xpose.msra.mxu0 0.0
        %1306 = vmatprep.subr.mxu0 0.0
        %1307 = vmatpush1.xpose.msra.mxu0 0.0
        %1308 = vmatprep.subr.mxu0 0.0
        %1309 = vmatpush1.xpose.msra.mxu0 0.0
        %1310 = vmatprep.subr.mxu0 0.0
        %1311 = vmatpush1.xpose.msra.mxu0 0.0
        %1312 = vmatprep.subr.mxu0 0.0
        %1313 = vmatpush1.xpose.msra.mxu0 0.0
        %1314 = vmatprep.subr.mxu0 0.0
        %1315 = vmatpush1.xpose.msra.mxu0 0.0
        %1316 = vmatprep.subr.mxu0 0.0
        %1317 = vmatpush1.xpose.msra.mxu0 0.0
        %1318 = vmatprep.subr.mxu0 0.0
        %1319 = vmatpush1.xpose.msra.mxu0 0.0
        %1320 = vmatprep.subr.mxu0 0.0
        %1321 = vmatpush1.xpose.msra.mxu0 0.0
        %1322 = vmatprep.subr.mxu0 0.0
        %1323 = vmatpush1.xpose.msra.mxu0 0.0
        %1324 = vmatprep.subr.mxu0 0.0
        %1325 = vmatpush1.xpose.msra.mxu0 0.0
        %1326 = vmatprep.subr.mxu0 0.0
        %1327 = vmatpush1.xpose.msra.mxu0 0.0
        %1328 = vmatprep.subr.mxu0 0.0
        %v1329 = vand.u32 %v172, 4294901760
        %1330 = vmatpush1.xpose.msra.mxu0 %v1329
        %1331 = vmatprep.subr.mxu0 0.0
        %1332 = vmatpush2.xpose.msra.mxu0 0.0
        %1333 = vmatprep.subr.mxu0 0.0
        %1334 = vmatpush2.xpose.msra.mxu0 0.0
        %1335 = vmatprep.subr.mxu0 0.0
        %1336 = vmatpush2.xpose.msra.mxu0 0.0
        %1337 = vmatprep.subr.mxu0 0.0
        %1338 = vmatpush2.xpose.msra.mxu0 0.0
        %1339 = vmatprep.subr.mxu0 0.0
        %1340 = vmatpush2.xpose.msra.mxu0 0.0
        %1341 = vmatprep.subr.mxu0 0.0
        %1342 = vmatpush2.xpose.msra.mxu0 0.0
        %1343 = vmatprep.subr.mxu0 0.0
        %1344 = vmatpush2.xpose.msra.mxu0 0.0
        %1345 = vmatprep.subr.mxu0 0.0
        %1346 = vmatpush2.xpose.msra.mxu0 0.0
        %1347 = vmatprep.subr.mxu0 0.0
        %1348 = vmatpush2.xpose.msra.mxu0 0.0
        %1349 = vmatprep.subr.mxu0 0.0
        %1350 = vmatpush2.xpose.msra.mxu0 0.0
        %1351 = vmatprep.subr.mxu0 0.0
        %1352 = vmatpush2.xpose.msra.mxu0 0.0
        %1353 = vmatprep.subr.mxu0 0.0
        %1354 = vmatpush2.xpose.msra.mxu0 0.0
        %1355 = vmatprep.subr.mxu0 0.0
        %1356 = vmatpush2.xpose.msra.mxu0 0.0
        %1357 = vmatprep.subr.mxu0 0.0
        %1358 = vmatpush2.xpose.msra.mxu0 0.0
        %1359 = vmatprep.subr.mxu0 0.0
        %1360 = vmatpush2.xpose.msra.mxu0 0.0
        %1361 = vmatprep.subr.mxu0 0.0
        %1362 = vmatpush2.xpose.msra.mxu0 0.0
        %1363 = vmatprep.mubr.f32.mxu0 0.0
        %v1364 = vand.u32 %v1070, 4294901760
        %v1365 = vsub.f32 %v1070, %v1364
        %v1366 = vand.u32 %v1365, 4294901760
        %1367 = vmatmul.mubr.f32.gmra.mxu0 %v1366
        %v1368 = vpop.f32.mrf.mxu0
        %v1369 = vadd.f32 %v1295, %v1368
        %v1370 = vpop.f32.mrf.mxu0
        %1371 = vdwg.mxu0
        %1372 = vmatprep.subr.mxu0 0.0
        %1373 = vmatpush1.xpose.msra.mxu0 0.0
        %1374 = vmatprep.subr.mxu0 0.0
        %1375 = vmatpush1.xpose.msra.mxu0 0.0
        %1376 = vmatprep.subr.mxu0 0.0
        %1377 = vmatpush1.xpose.msra.mxu0 0.0
        %1378 = vmatprep.subr.mxu0 0.0
        %1379 = vmatpush1.xpose.msra.mxu0 0.0
        %1380 = vmatprep.subr.mxu0 0.0
        %1381 = vmatpush1.xpose.msra.mxu0 0.0
        %1382 = vmatprep.subr.mxu0 0.0
        %1383 = vmatpush1.xpose.msra.mxu0 0.0
        %1384 = vmatprep.subr.mxu0 0.0
        %1385 = vmatpush1.xpose.msra.mxu0 0.0
        %1386 = vmatprep.subr.mxu0 0.0
        %1387 = vmatpush1.xpose.msra.mxu0 0.0
        %1388 = vmatprep.subr.mxu0 0.0
        %1389 = vmatpush1.xpose.msra.mxu0 0.0
        %1390 = vmatprep.subr.mxu0 0.0
        %1391 = vmatpush1.xpose.msra.mxu0 0.0
        %1392 = vmatprep.subr.mxu0 0.0
        %1393 = vmatpush1.xpose.msra.mxu0 0.0
        %1394 = vmatprep.subr.mxu0 0.0
        %1395 = vmatpush1.xpose.msra.mxu0 0.0
        %1396 = vmatprep.subr.mxu0 0.0
        %1397 = vmatpush1.xpose.msra.mxu0 0.0
        %1398 = vmatprep.subr.mxu0 0.0
        %1399 = vmatpush1.xpose.msra.mxu0 0.0
        %1400 = vmatprep.subr.mxu0 0.0
        %1401 = vmatpush1.xpose.msra.mxu0 0.0
        %1402 = vmatprep.subr.mxu0 0.0
        %v1403 = vand.u32 %v172, 4294901760
        %v1404 = vsub.f32 %v172, %v1403
        %v1405 = vand.u32 %v1404, 4294901760
        %1406 = vmatpush1.xpose.msra.mxu0 %v1405
        %1407 = vmatprep.subr.mxu0 0.0
        %1408 = vmatpush2.xpose.msra.mxu0 0.0
        %1409 = vmatprep.subr.mxu0 0.0
        %1410 = vmatpush2.xpose.msra.mxu0 0.0
        %1411 = vmatprep.subr.mxu0 0.0
        %1412 = vmatpush2.xpose.msra.mxu0 0.0
        %1413 = vmatprep.subr.mxu0 0.0
        %1414 = vmatpush2.xpose.msra.mxu0 0.0
        %1415 = vmatprep.subr.mxu0 0.0
        %1416 = vmatpush2.xpose.msra.mxu0 0.0
        %1417 = vmatprep.subr.mxu0 0.0
        %1418 = vmatpush2.xpose.msra.mxu0 0.0
        %1419 = vmatprep.subr.mxu0 0.0
        %1420 = vmatpush2.xpose.msra.mxu0 0.0
        %1421 = vmatprep.subr.mxu0 0.0
        %1422 = vmatpush2.xpose.msra.mxu0 0.0
        %1423 = vmatprep.subr.mxu0 0.0
        %1424 = vmatpush2.xpose.msra.mxu0 0.0
        %1425 = vmatprep.subr.mxu0 0.0
        %1426 = vmatpush2.xpose.msra.mxu0 0.0
        %1427 = vmatprep.subr.mxu0 0.0
        %1428 = vmatpush2.xpose.msra.mxu0 0.0
        %1429 = vmatprep.subr.mxu0 0.0
        %1430 = vmatpush2.xpose.msra.mxu0 0.0
        %1431 = vmatprep.subr.mxu0 0.0
        %1432 = vmatpush2.xpose.msra.mxu0 0.0
        %1433 = vmatprep.subr.mxu0 0.0
        %1434 = vmatpush2.xpose.msra.mxu0 0.0
        %1435 = vmatprep.subr.mxu0 0.0
        %1436 = vmatpush2.xpose.msra.mxu0 0.0
        %1437 = vmatprep.subr.mxu0 0.0
        %1438 = vmatpush2.xpose.msra.mxu0 0.0
        %1439 = vmatprep.mubr.f32.mxu0 0.0
        %v1440 = vand.u32 %v1070, 4294901760
        %1441 = vmatmul.mubr.f32.gmra.mxu0 %v1440
        %v1442 = vpop.f32.mrf.mxu0
        %v1443 = vadd.f32 %v1369, %v1442
        %v1444 = vpop.f32.mrf.mxu0
        %1445 = vdwg.mxu0
        %1446 = vmatprep.subr.mxu0 0.0
        %1447 = vmatpush1.xpose.msra.mxu0 0.0
        %1448 = vmatprep.subr.mxu0 0.0
        %1449 = vmatpush1.xpose.msra.mxu0 0.0
        %1450 = vmatprep.subr.mxu0 0.0
        %1451 = vmatpush1.xpose.msra.mxu0 0.0
        %1452 = vmatprep.subr.mxu0 0.0
        %1453 = vmatpush1.xpose.msra.mxu0 0.0
        %1454 = vmatprep.subr.mxu0 0.0
        %1455 = vmatpush1.xpose.msra.mxu0 0.0
        %1456 = vmatprep.subr.mxu0 0.0
        %1457 = vmatpush1.xpose.msra.mxu0 0.0
        %1458 = vmatprep.subr.mxu0 0.0
        %1459 = vmatpush1.xpose.msra.mxu0 0.0
        %1460 = vmatprep.subr.mxu0 0.0
        %1461 = vmatpush1.xpose.msra.mxu0 0.0
        %1462 = vmatprep.subr.mxu0 0.0
        %1463 = vmatpush1.xpose.msra.mxu0 0.0
        %1464 = vmatprep.subr.mxu0 0.0
        %1465 = vmatpush1.xpose.msra.mxu0 0.0
        %1466 = vmatprep.subr.mxu0 0.0
        %1467 = vmatpush1.xpose.msra.mxu0 0.0
        %1468 = vmatprep.subr.mxu0 0.0
        %1469 = vmatpush1.xpose.msra.mxu0 0.0
        %1470 = vmatprep.subr.mxu0 0.0
        %1471 = vmatpush1.xpose.msra.mxu0 0.0
        %1472 = vmatprep.subr.mxu0 0.0
        %1473 = vmatpush1.xpose.msra.mxu0 0.0
        %1474 = vmatprep.subr.mxu0 0.0
        %1475 = vmatpush1.xpose.msra.mxu0 0.0
        %1476 = vmatprep.subr.mxu0 0.0
        %v1477 = vand.u32 %v172, 4294901760
        %1478 = vmatpush1.xpose.msra.mxu0 %v1477
        %1479 = vmatprep.subr.mxu0 0.0
        %1480 = vmatpush2.xpose.msra.mxu0 0.0
        %1481 = vmatprep.subr.mxu0 0.0
        %1482 = vmatpush2.xpose.msra.mxu0 0.0
        %1483 = vmatprep.subr.mxu0 0.0
        %1484 = vmatpush2.xpose.msra.mxu0 0.0
        %1485 = vmatprep.subr.mxu0 0.0
        %1486 = vmatpush2.xpose.msra.mxu0 0.0
        %1487 = vmatprep.subr.mxu0 0.0
        %1488 = vmatpush2.xpose.msra.mxu0 0.0
        %1489 = vmatprep.subr.mxu0 0.0
        %1490 = vmatpush2.xpose.msra.mxu0 0.0
        %1491 = vmatprep.subr.mxu0 0.0
        %1492 = vmatpush2.xpose.msra.mxu0 0.0
        %1493 = vmatprep.subr.mxu0 0.0
        %1494 = vmatpush2.xpose.msra.mxu0 0.0
        %1495 = vmatprep.subr.mxu0 0.0
        %1496 = vmatpush2.xpose.msra.mxu0 0.0
        %1497 = vmatprep.subr.mxu0 0.0
        %1498 = vmatpush2.xpose.msra.mxu0 0.0
        %1499 = vmatprep.subr.mxu0 0.0
        %1500 = vmatpush2.xpose.msra.mxu0 0.0
        %1501 = vmatprep.subr.mxu0 0.0
        %1502 = vmatpush2.xpose.msra.mxu0 0.0
        %1503 = vmatprep.subr.mxu0 0.0
        %1504 = vmatpush2.xpose.msra.mxu0 0.0
        %1505 = vmatprep.subr.mxu0 0.0
        %1506 = vmatpush2.xpose.msra.mxu0 0.0
        %1507 = vmatprep.subr.mxu0 0.0
        %1508 = vmatpush2.xpose.msra.mxu0 0.0
        %1509 = vmatprep.subr.mxu0 0.0
        %1510 = vmatpush2.xpose.msra.mxu0 0.0
        %1511 = vmatprep.mubr.f32.mxu0 0.0
        %v1512 = vand.u32 %v1070, 4294901760
        %1513 = vmatmul.mubr.f32.gmra.mxu0 %v1512
        %v1514 = vpop.f32.mrf.mxu0
        %v1515 = vadd.f32 %v1443, %v1514
        %v1516 = vpop.f32.mrf.mxu0
        %1517 = vdwg.mxu0
        %v1519 = vsel %vm167, %v160, 0
        %1521 = vmatprep.subr.mxu0 0.0
        %1522 = vmatpush1.xpose.msra.mxu0 0.0
        %1523 = vmatprep.subr.mxu0 0.0
        %1524 = vmatpush1.xpose.msra.mxu0 0.0
        %1525 = vmatprep.subr.mxu0 0.0
        %1526 = vmatpush1.xpose.msra.mxu0 0.0
        %1527 = vmatprep.subr.mxu0 0.0
        %1528 = vmatpush1.xpose.msra.mxu0 0.0
        %1529 = vmatprep.subr.mxu0 0.0
        %1530 = vmatpush1.xpose.msra.mxu0 0.0
        %1531 = vmatprep.subr.mxu0 0.0
        %1532 = vmatpush1.xpose.msra.mxu0 0.0
        %1533 = vmatprep.subr.mxu0 0.0
        %1534 = vmatpush1.xpose.msra.mxu0 0.0
        %1535 = vmatprep.subr.mxu0 0.0
        %1536 = vmatpush1.xpose.msra.mxu0 0.0
        %1537 = vmatprep.subr.mxu0 0.0
        %1538 = vmatpush1.xpose.msra.mxu0 0.0
        %1539 = vmatprep.subr.mxu0 0.0
        %1540 = vmatpush1.xpose.msra.mxu0 0.0
        %1541 = vmatprep.subr.mxu0 0.0
        %1542 = vmatpush1.xpose.msra.mxu0 0.0
        %1543 = vmatprep.subr.mxu0 0.0
        %1544 = vmatpush1.xpose.msra.mxu0 0.0
        %1545 = vmatprep.subr.mxu0 0.0
        %1546 = vmatpush1.xpose.msra.mxu0 0.0
        %1547 = vmatprep.subr.mxu0 0.0
        %1548 = vmatpush1.xpose.msra.mxu0 0.0
        %1549 = vmatprep.subr.mxu0 0.0
        %1550 = vmatpush1.xpose.msra.mxu0 0.0
        %1551 = vmatprep.subr.mxu0 0.0
        %v1552 = vand.u32 %v172, 4294901760
        %1553 = vmatpush1.xpose.msra.mxu0 %v1552
        %1554 = vmatprep.subr.mxu0 0.0
        %1555 = vmatpush2.xpose.msra.mxu0 0.0
        %1556 = vmatprep.subr.mxu0 0.0
        %1557 = vmatpush2.xpose.msra.mxu0 0.0
        %1558 = vmatprep.subr.mxu0 0.0
        %1559 = vmatpush2.xpose.msra.mxu0 0.0
        %1560 = vmatprep.subr.mxu0 0.0
        %1561 = vmatpush2.xpose.msra.mxu0 0.0
        %1562 = vmatprep.subr.mxu0 0.0
        %1563 = vmatpush2.xpose.msra.mxu0 0.0
        %1564 = vmatprep.subr.mxu0 0.0
        %1565 = vmatpush2.xpose.msra.mxu0 0.0
        %1566 = vmatprep.subr.mxu0 0.0
        %1567 = vmatpush2.xpose.msra.mxu0 0.0
        %1568 = vmatprep.subr.mxu0 0.0
        %1569 = vmatpush2.xpose.msra.mxu0 0.0
        %1570 = vmatprep.subr.mxu0 0.0
        %1571 = vmatpush2.xpose.msra.mxu0 0.0
        %1572 = vmatprep.subr.mxu0 0.0
        %1573 = vmatpush2.xpose.msra.mxu0 0.0
        %1574 = vmatprep.subr.mxu0 0.0
        %1575 = vmatpush2.xpose.msra.mxu0 0.0
        %1576 = vmatprep.subr.mxu0 0.0
        %1577 = vmatpush2.xpose.msra.mxu0 0.0
        %1578 = vmatprep.subr.mxu0 0.0
        %1579 = vmatpush2.xpose.msra.mxu0 0.0
        %1580 = vmatprep.subr.mxu0 0.0
        %1581 = vmatpush2.xpose.msra.mxu0 0.0
        %1582 = vmatprep.subr.mxu0 0.0
        %1583 = vmatpush2.xpose.msra.mxu0 0.0
        %1584 = vmatprep.subr.mxu0 0.0
        %1585 = vmatpush2.xpose.msra.mxu0 0.0
        %1586 = vmatprep.mubr.f32.mxu0 0.0
        %v1587 = vand.u32 %v1519, 4294901760
        %v1588 = vsub.f32 %v1519, %v1587
        %v1589 = vand.u32 %v1588, 4294901760
        %v1590 = vsub.f32 %v1588, %v1589
        %v1591 = vand.u32 %v1590, 4294901760
        %1592 = vmatmul.mubr.f32.gmra.mxu0 %v1591
        %v1593 = vpop.f32.mrf.mxu0
        %v1594 = vadd.f32 0.0, %v1593
        %v1595 = vpop.f32.mrf.mxu0
        %1596 = vdwg.mxu0
        %1597 = vmatprep.subr.mxu0 0.0
        %1598 = vmatpush1.xpose.msra.mxu0 0.0
        %1599 = vmatprep.subr.mxu0 0.0
        %1600 = vmatpush1.xpose.msra.mxu0 0.0
        %1601 = vmatprep.subr.mxu0 0.0
        %1602 = vmatpush1.xpose.msra.mxu0 0.0
        %1603 = vmatprep.subr.mxu0 0.0
        %1604 = vmatpush1.xpose.msra.mxu0 0.0
        %1605 = vmatprep.subr.mxu0 0.0
        %1606 = vmatpush1.xpose.msra.mxu0 0.0
        %1607 = vmatprep.subr.mxu0 0.0
        %1608 = vmatpush1.xpose.msra.mxu0 0.0
        %1609 = vmatprep.subr.mxu0 0.0
        %1610 = vmatpush1.xpose.msra.mxu0 0.0
        %1611 = vmatprep.subr.mxu0 0.0
        %1612 = vmatpush1.xpose.msra.mxu0 0.0
        %1613 = vmatprep.subr.mxu0 0.0
        %1614 = vmatpush1.xpose.msra.mxu0 0.0
        %1615 = vmatprep.subr.mxu0 0.0
        %1616 = vmatpush1.xpose.msra.mxu0 0.0
        %1617 = vmatprep.subr.mxu0 0.0
        %1618 = vmatpush1.xpose.msra.mxu0 0.0
        %1619 = vmatprep.subr.mxu0 0.0
        %1620 = vmatpush1.xpose.msra.mxu0 0.0
        %1621 = vmatprep.subr.mxu0 0.0
        %1622 = vmatpush1.xpose.msra.mxu0 0.0
        %1623 = vmatprep.subr.mxu0 0.0
        %1624 = vmatpush1.xpose.msra.mxu0 0.0
        %1625 = vmatprep.subr.mxu0 0.0
        %1626 = vmatpush1.xpose.msra.mxu0 0.0
        %1627 = vmatprep.subr.mxu0 0.0
        %v1628 = vand.u32 %v172, 4294901760
        %v1629 = vsub.f32 %v172, %v1628
        %v1630 = vand.u32 %v1629, 4294901760
        %v1631 = vsub.f32 %v1629, %v1630
        %v1632 = vand.u32 %v1631, 4294901760
        %1633 = vmatpush1.xpose.msra.mxu0 %v1632
        %1634 = vmatprep.subr.mxu0 0.0
        %1635 = vmatpush2.xpose.msra.mxu0 0.0
        %1636 = vmatprep.subr.mxu0 0.0
        %1637 = vmatpush2.xpose.msra.mxu0 0.0
        %1638 = vmatprep.subr.mxu0 0.0
        %1639 = vmatpush2.xpose.msra.mxu0 0.0
        %1640 = vmatprep.subr.mxu0 0.0
        %1641 = vmatpush2.xpose.msra.mxu0 0.0
        %1642 = vmatprep.subr.mxu0 0.0
        %1643 = vmatpush2.xpose.msra.mxu0 0.0
        %1644 = vmatprep.subr.mxu0 0.0
        %1645 = vmatpush2.xpose.msra.mxu0 0.0
        %1646 = vmatprep.subr.mxu0 0.0
        %1647 = vmatpush2.xpose.msra.mxu0 0.0
        %1648 = vmatprep.subr.mxu0 0.0
        %1649 = vmatpush2.xpose.msra.mxu0 0.0
        %1650 = vmatprep.subr.mxu0 0.0
        %1651 = vmatpush2.xpose.msra.mxu0 0.0
        %1652 = vmatprep.subr.mxu0 0.0
        %1653 = vmatpush2.xpose.msra.mxu0 0.0
        %1654 = vmatprep.subr.mxu0 0.0
        %1655 = vmatpush2.xpose.msra.mxu0 0.0
        %1656 = vmatprep.subr.mxu0 0.0
        %1657 = vmatpush2.xpose.msra.mxu0 0.0
        %1658 = vmatprep.subr.mxu0 0.0
        %1659 = vmatpush2.xpose.msra.mxu0 0.0
        %1660 = vmatprep.subr.mxu0 0.0
        %1661 = vmatpush2.xpose.msra.mxu0 0.0
        %1662 = vmatprep.subr.mxu0 0.0
        %1663 = vmatpush2.xpose.msra.mxu0 0.0
        %1664 = vmatprep.subr.mxu0 0.0
        %1665 = vmatpush2.xpose.msra.mxu0 0.0
        %1666 = vmatprep.mubr.f32.mxu0 0.0
        %v1667 = vand.u32 %v1519, 4294901760
        %1668 = vmatmul.mubr.f32.gmra.mxu0 %v1667
        %v1669 = vpop.f32.mrf.mxu0
        %v1670 = vadd.f32 %v1594, %v1669
        %v1671 = vpop.f32.mrf.mxu0
        %1672 = vdwg.mxu0
        %1673 = vmatprep.subr.mxu0 0.0
        %1674 = vmatpush1.xpose.msra.mxu0 0.0
        %1675 = vmatprep.subr.mxu0 0.0
        %1676 = vmatpush1.xpose.msra.mxu0 0.0
        %1677 = vmatprep.subr.mxu0 0.0
        %1678 = vmatpush1.xpose.msra.mxu0 0.0
        %1679 = vmatprep.subr.mxu0 0.0
        %1680 = vmatpush1.xpose.msra.mxu0 0.0
        %1681 = vmatprep.subr.mxu0 0.0
        %1682 = vmatpush1.xpose.msra.mxu0 0.0
        %1683 = vmatprep.subr.mxu0 0.0
        %1684 = vmatpush1.xpose.msra.mxu0 0.0
        %1685 = vmatprep.subr.mxu0 0.0
        %1686 = vmatpush1.xpose.msra.mxu0 0.0
        %1687 = vmatprep.subr.mxu0 0.0
        %1688 = vmatpush1.xpose.msra.mxu0 0.0
        %1689 = vmatprep.subr.mxu0 0.0
        %1690 = vmatpush1.xpose.msra.mxu0 0.0
        %1691 = vmatprep.subr.mxu0 0.0
        %1692 = vmatpush1.xpose.msra.mxu0 0.0
        %1693 = vmatprep.subr.mxu0 0.0
        %1694 = vmatpush1.xpose.msra.mxu0 0.0
        %1695 = vmatprep.subr.mxu0 0.0
        %1696 = vmatpush1.xpose.msra.mxu0 0.0
        %1697 = vmatprep.subr.mxu0 0.0
        %1698 = vmatpush1.xpose.msra.mxu0 0.0
        %1699 = vmatprep.subr.mxu0 0.0
        %1700 = vmatpush1.xpose.msra.mxu0 0.0
        %1701 = vmatprep.subr.mxu0 0.0
        %1702 = vmatpush1.xpose.msra.mxu0 0.0
        %1703 = vmatprep.subr.mxu0 0.0
        %v1704 = vand.u32 %v172, 4294901760
        %v1705 = vsub.f32 %v172, %v1704
        %1706 = vmatpush1.xpose.msra.mxu0 %v1705
        %1707 = vmatprep.subr.mxu0 0.0
        %1708 = vmatpush2.xpose.msra.mxu0 0.0
        %1709 = vmatprep.subr.mxu0 0.0
        %1710 = vmatpush2.xpose.msra.mxu0 0.0
        %1711 = vmatprep.subr.mxu0 0.0
        %1712 = vmatpush2.xpose.msra.mxu0 0.0
        %1713 = vmatprep.subr.mxu0 0.0
        %1714 = vmatpush2.xpose.msra.mxu0 0.0
        %1715 = vmatprep.subr.mxu0 0.0
        %1716 = vmatpush2.xpose.msra.mxu0 0.0
        %1717 = vmatprep.subr.mxu0 0.0
        %1718 = vmatpush2.xpose.msra.mxu0 0.0
        %1719 = vmatprep.subr.mxu0 0.0
        %1720 = vmatpush2.xpose.msra.mxu0 0.0
        %1721 = vmatprep.subr.mxu0 0.0
        %1722 = vmatpush2.xpose.msra.mxu0 0.0
        %1723 = vmatprep.subr.mxu0 0.0
        %1724 = vmatpush2.xpose.msra.mxu0 0.0
        %1725 = vmatprep.subr.mxu0 0.0
        %1726 = vmatpush2.xpose.msra.mxu0 0.0
        %1727 = vmatprep.subr.mxu0 0.0
        %1728 = vmatpush2.xpose.msra.mxu0 0.0
        %1729 = vmatprep.subr.mxu0 0.0
        %1730 = vmatpush2.xpose.msra.mxu0 0.0
        %1731 = vmatprep.subr.mxu0 0.0
        %1732 = vmatpush2.xpose.msra.mxu0 0.0
        %1733 = vmatprep.subr.mxu0 0.0
        %1734 = vmatpush2.xpose.msra.mxu0 0.0
        %1735 = vmatprep.subr.mxu0 0.0
        %1736 = vmatpush2.xpose.msra.mxu0 0.0
        %1737 = vmatprep.subr.mxu0 0.0
        %1738 = vmatpush2.xpose.msra.mxu0 0.0
        %1739 = vmatprep.mubr.f32.mxu0 0.0
        %v1740 = vand.u32 %v1519, 4294901760
        %v1741 = vsub.f32 %v1519, %v1740
        %1742 = vmatmul.mubr.f32.gmra.mxu0 %v1741
        %v1743 = vpop.f32.mrf.mxu0
        %v1744 = vadd.f32 %v1670, %v1743
        %v1745 = vpop.f32.mrf.mxu0
        %1746 = vdwg.mxu0
        %1747 = vmatprep.subr.mxu0 0.0
        %1748 = vmatpush1.xpose.msra.mxu0 0.0
        %1749 = vmatprep.subr.mxu0 0.0
        %1750 = vmatpush1.xpose.msra.mxu0 0.0
        %1751 = vmatprep.subr.mxu0 0.0
        %1752 = vmatpush1.xpose.msra.mxu0 0.0
        %1753 = vmatprep.subr.mxu0 0.0
        %1754 = vmatpush1.xpose.msra.mxu0 0.0
        %1755 = vmatprep.subr.mxu0 0.0
        %1756 = vmatpush1.xpose.msra.mxu0 0.0
        %1757 = vmatprep.subr.mxu0 0.0
        %1758 = vmatpush1.xpose.msra.mxu0 0.0
        %1759 = vmatprep.subr.mxu0 0.0
        %1760 = vmatpush1.xpose.msra.mxu0 0.0
        %1761 = vmatprep.subr.mxu0 0.0
        %1762 = vmatpush1.xpose.msra.mxu0 0.0
        %1763 = vmatprep.subr.mxu0 0.0
        %1764 = vmatpush1.xpose.msra.mxu0 0.0
        %1765 = vmatprep.subr.mxu0 0.0
        %1766 = vmatpush1.xpose.msra.mxu0 0.0
        %1767 = vmatprep.subr.mxu0 0.0
        %1768 = vmatpush1.xpose.msra.mxu0 0.0
        %1769 = vmatprep.subr.mxu0 0.0
        %1770 = vmatpush1.xpose.msra.mxu0 0.0
        %1771 = vmatprep.subr.mxu0 0.0
        %1772 = vmatpush1.xpose.msra.mxu0 0.0
        %1773 = vmatprep.subr.mxu0 0.0
        %1774 = vmatpush1.xpose.msra.mxu0 0.0
        %1775 = vmatprep.subr.mxu0 0.0
        %1776 = vmatpush1.xpose.msra.mxu0 0.0
        %1777 = vmatprep.subr.mxu0 0.0
        %v1778 = vand.u32 %v172, 4294901760
        %1779 = vmatpush1.xpose.msra.mxu0 %v1778
        %1780 = vmatprep.subr.mxu0 0.0
        %1781 = vmatpush2.xpose.msra.mxu0 0.0
        %1782 = vmatprep.subr.mxu0 0.0
        %1783 = vmatpush2.xpose.msra.mxu0 0.0
        %1784 = vmatprep.subr.mxu0 0.0
        %1785 = vmatpush2.xpose.msra.mxu0 0.0
        %1786 = vmatprep.subr.mxu0 0.0
        %1787 = vmatpush2.xpose.msra.mxu0 0.0
        %1788 = vmatprep.subr.mxu0 0.0
        %1789 = vmatpush2.xpose.msra.mxu0 0.0
        %1790 = vmatprep.subr.mxu0 0.0
        %1791 = vmatpush2.xpose.msra.mxu0 0.0
        %1792 = vmatprep.subr.mxu0 0.0
        %1793 = vmatpush2.xpose.msra.mxu0 0.0
        %1794 = vmatprep.subr.mxu0 0.0
        %1795 = vmatpush2.xpose.msra.mxu0 0.0
        %1796 = vmatprep.subr.mxu0 0.0
        %1797 = vmatpush2.xpose.msra.mxu0 0.0
        %1798 = vmatprep.subr.mxu0 0.0
        %1799 = vmatpush2.xpose.msra.mxu0 0.0
        %1800 = vmatprep.subr.mxu0 0.0
        %1801 = vmatpush2.xpose.msra.mxu0 0.0
        %1802 = vmatprep.subr.mxu0 0.0
        %1803 = vmatpush2.xpose.msra.mxu0 0.0
        %1804 = vmatprep.subr.mxu0 0.0
        %1805 = vmatpush2.xpose.msra.mxu0 0.0
        %1806 = vmatprep.subr.mxu0 0.0
        %1807 = vmatpush2.xpose.msra.mxu0 0.0
        %1808 = vmatprep.subr.mxu0 0.0
        %1809 = vmatpush2.xpose.msra.mxu0 0.0
        %1810 = vmatprep.subr.mxu0 0.0
        %1811 = vmatpush2.xpose.msra.mxu0 0.0
        %1812 = vmatprep.mubr.f32.mxu0 0.0
        %v1813 = vand.u32 %v1519, 4294901760
        %v1814 = vsub.f32 %v1519, %v1813
        %v1815 = vand.u32 %v1814, 4294901760
        %1816 = vmatmul.mubr.f32.gmra.mxu0 %v1815
        %v1817 = vpop.f32.mrf.mxu0
        %v1818 = vadd.f32 %v1744, %v1817
        %v1819 = vpop.f32.mrf.mxu0
        %1820 = vdwg.mxu0
        %1821 = vmatprep.subr.mxu0 0.0
        %1822 = vmatpush1.xpose.msra.mxu0 0.0
        %1823 = vmatprep.subr.mxu0 0.0
        %1824 = vmatpush1.xpose.msra.mxu0 0.0
        %1825 = vmatprep.subr.mxu0 0.0
        %1826 = vmatpush1.xpose.msra.mxu0 0.0
        %1827 = vmatprep.subr.mxu0 0.0
        %1828 = vmatpush1.xpose.msra.mxu0 0.0
        %1829 = vmatprep.subr.mxu0 0.0
        %1830 = vmatpush1.xpose.msra.mxu0 0.0
        %1831 = vmatprep.subr.mxu0 0.0
        %1832 = vmatpush1.xpose.msra.mxu0 0.0
        %1833 = vmatprep.subr.mxu0 0.0
        %1834 = vmatpush1.xpose.msra.mxu0 0.0
        %1835 = vmatprep.subr.mxu0 0.0
        %1836 = vmatpush1.xpose.msra.mxu0 0.0
        %1837 = vmatprep.subr.mxu0 0.0
        %1838 = vmatpush1.xpose.msra.mxu0 0.0
        %1839 = vmatprep.subr.mxu0 0.0
        %1840 = vmatpush1.xpose.msra.mxu0 0.0
        %1841 = vmatprep.subr.mxu0 0.0
        %1842 = vmatpush1.xpose.msra.mxu0 0.0
        %1843 = vmatprep.subr.mxu0 0.0
        %1844 = vmatpush1.xpose.msra.mxu0 0.0
        %1845 = vmatprep.subr.mxu0 0.0
        %1846 = vmatpush1.xpose.msra.mxu0 0.0
        %1847 = vmatprep.subr.mxu0 0.0
        %1848 = vmatpush1.xpose.msra.mxu0 0.0
        %1849 = vmatprep.subr.mxu0 0.0
        %1850 = vmatpush1.xpose.msra.mxu0 0.0
        %1851 = vmatprep.subr.mxu0 0.0
        %v1852 = vand.u32 %v172, 4294901760
        %v1853 = vsub.f32 %v172, %v1852
        %v1854 = vand.u32 %v1853, 4294901760
        %1855 = vmatpush1.xpose.msra.mxu0 %v1854
        %1856 = vmatprep.subr.mxu0 0.0
        %1857 = vmatpush2.xpose.msra.mxu0 0.0
        %1858 = vmatprep.subr.mxu0 0.0
        %1859 = vmatpush2.xpose.msra.mxu0 0.0
        %1860 = vmatprep.subr.mxu0 0.0
        %1861 = vmatpush2.xpose.msra.mxu0 0.0
        %1862 = vmatprep.subr.mxu0 0.0
        %1863 = vmatpush2.xpose.msra.mxu0 0.0
        %1864 = vmatprep.subr.mxu0 0.0
        %1865 = vmatpush2.xpose.msra.mxu0 0.0
        %1866 = vmatprep.subr.mxu0 0.0
        %1867 = vmatpush2.xpose.msra.mxu0 0.0
        %1868 = vmatprep.subr.mxu0 0.0
        %1869 = vmatpush2.xpose.msra.mxu0 0.0
        %1870 = vmatprep.subr.mxu0 0.0
        %1871 = vmatpush2.xpose.msra.mxu0 0.0
        %1872 = vmatprep.subr.mxu0 0.0
        %1873 = vmatpush2.xpose.msra.mxu0 0.0
        %1874 = vmatprep.subr.mxu0 0.0
        %1875 = vmatpush2.xpose.msra.mxu0 0.0
        %1876 = vmatprep.subr.mxu0 0.0
        %1877 = vmatpush2.xpose.msra.mxu0 0.0
        %1878 = vmatprep.subr.mxu0 0.0
        %1879 = vmatpush2.xpose.msra.mxu0 0.0
        %1880 = vmatprep.subr.mxu0 0.0
        %1881 = vmatpush2.xpose.msra.mxu0 0.0
        %1882 = vmatprep.subr.mxu0 0.0
        %1883 = vmatpush2.xpose.msra.mxu0 0.0
        %1884 = vmatprep.subr.mxu0 0.0
        %1885 = vmatpush2.xpose.msra.mxu0 0.0
        %1886 = vmatprep.subr.mxu0 0.0
        %1887 = vmatpush2.xpose.msra.mxu0 0.0
        %1888 = vmatprep.mubr.f32.mxu0 0.0
        %v1889 = vand.u32 %v1519, 4294901760
        %1890 = vmatmul.mubr.f32.gmra.mxu0 %v1889
        %v1891 = vpop.f32.mrf.mxu0
        %v1892 = vadd.f32 %v1818, %v1891
        %v1893 = vpop.f32.mrf.mxu0
        %1894 = vdwg.mxu0
        %1895 = vmatprep.subr.mxu0 0.0
        %1896 = vmatpush1.xpose.msra.mxu0 0.0
        %1897 = vmatprep.subr.mxu0 0.0
        %1898 = vmatpush1.xpose.msra.mxu0 0.0
        %1899 = vmatprep.subr.mxu0 0.0
        %1900 = vmatpush1.xpose.msra.mxu0 0.0
        %1901 = vmatprep.subr.mxu0 0.0
        %1902 = vmatpush1.xpose.msra.mxu0 0.0
        %1903 = vmatprep.subr.mxu0 0.0
        %1904 = vmatpush1.xpose.msra.mxu0 0.0
        %1905 = vmatprep.subr.mxu0 0.0
        %1906 = vmatpush1.xpose.msra.mxu0 0.0
        %1907 = vmatprep.subr.mxu0 0.0
        %1908 = vmatpush1.xpose.msra.mxu0 0.0
        %1909 = vmatprep.subr.mxu0 0.0
        %1910 = vmatpush1.xpose.msra.mxu0 0.0
        %1911 = vmatprep.subr.mxu0 0.0
        %1912 = vmatpush1.xpose.msra.mxu0 0.0
        %1913 = vmatprep.subr.mxu0 0.0
        %1914 = vmatpush1.xpose.msra.mxu0 0.0
        %1915 = vmatprep.subr.mxu0 0.0
        %1916 = vmatpush1.xpose.msra.mxu0 0.0
        %1917 = vmatprep.subr.mxu0 0.0
        %1918 = vmatpush1.xpose.msra.mxu0 0.0
        %1919 = vmatprep.subr.mxu0 0.0
        %1920 = vmatpush1.xpose.msra.mxu0 0.0
        %1921 = vmatprep.subr.mxu0 0.0
        %1922 = vmatpush1.xpose.msra.mxu0 0.0
        %1923 = vmatprep.subr.mxu0 0.0
        %1924 = vmatpush1.xpose.msra.mxu0 0.0
        %1925 = vmatprep.subr.mxu0 0.0
        %v1926 = vand.u32 %v172, 4294901760
        %1927 = vmatpush1.xpose.msra.mxu0 %v1926
        %1928 = vmatprep.subr.mxu0 0.0
        %1929 = vmatpush2.xpose.msra.mxu0 0.0
        %1930 = vmatprep.subr.mxu0 0.0
        %1931 = vmatpush2.xpose.msra.mxu0 0.0
        %1932 = vmatprep.subr.mxu0 0.0
        %1933 = vmatpush2.xpose.msra.mxu0 0.0
        %1934 = vmatprep.subr.mxu0 0.0
        %1935 = vmatpush2.xpose.msra.mxu0 0.0
        %1936 = vmatprep.subr.mxu0 0.0
        %1937 = vmatpush2.xpose.msra.mxu0 0.0
        %1938 = vmatprep.subr.mxu0 0.0
        %1939 = vmatpush2.xpose.msra.mxu0 0.0
        %1940 = vmatprep.subr.mxu0 0.0
        %1941 = vmatpush2.xpose.msra.mxu0 0.0
        %1942 = vmatprep.subr.mxu0 0.0
        %1943 = vmatpush2.xpose.msra.mxu0 0.0
        %1944 = vmatprep.subr.mxu0 0.0
        %1945 = vmatpush2.xpose.msra.mxu0 0.0
        %1946 = vmatprep.subr.mxu0 0.0
        %1947 = vmatpush2.xpose.msra.mxu0 0.0
        %1948 = vmatprep.subr.mxu0 0.0
        %1949 = vmatpush2.xpose.msra.mxu0 0.0
        %1950 = vmatprep.subr.mxu0 0.0
        %1951 = vmatpush2.xpose.msra.mxu0 0.0
        %1952 = vmatprep.subr.mxu0 0.0
        %1953 = vmatpush2.xpose.msra.mxu0 0.0
        %1954 = vmatprep.subr.mxu0 0.0
        %1955 = vmatpush2.xpose.msra.mxu0 0.0
        %1956 = vmatprep.subr.mxu0 0.0
        %1957 = vmatpush2.xpose.msra.mxu0 0.0
        %1958 = vmatprep.subr.mxu0 0.0
        %1959 = vmatpush2.xpose.msra.mxu0 0.0
        %1960 = vmatprep.mubr.f32.mxu0 0.0
        %v1961 = vand.u32 %v1519, 4294901760
        %1962 = vmatmul.mubr.f32.gmra.mxu0 %v1961
        %v1963 = vpop.f32.mrf.mxu0
        %v1964 = vadd.f32 %v1892, %v1963
        %v1965 = vpop.f32.mrf.mxu0
        %1966 = vdwg.mxu0
        %vm1967 = vcmask 64512
        %1968 = vst.msk [vmem:[%s134] sm:$0xff] %vm1967, 0.0
        %1969 = vst.msk [vmem:[%s134 + $0x8] sm:$0xff] %vm1967, 0.0
        %1970 = vst.msk [vmem:[%s134 + $0x10] sm:$0xff] %vm1967, %v617
        %1971 = vst.msk [vmem:[%s134 + $0x18] sm:$0xff] %vm1967, %v1066
        %1972 = vst.msk [vmem:[%s134 + $0x20] sm:$0xff] %vm1967, %v1515
        %1973 = vst.msk [vmem:[%s134 + $0x28] sm:$0xff] %vm1967, %v1964
        %1974 = vst.msk [vmem:[%s134 + $0x30] sm:$0xff] %vm1967, 0.0
        %1975 = vst.msk [vmem:[%s134 + $0x38] sm:$0xff] %vm1967, 0.0
        %s1976 = sand.u32 %s52, 1
        %s1977 = scalar_lea.sflag [#allocation4], %s1976
        %s1978 = sand.u32 %s52, 1
        %s1979 = smul.addr %s1978, 64
        %s1980 = scalar_lea.vmem [#allocation5], %s1979
        // Predicated region
        $region29: #{tpu_custom_call.1} parent=23 // pred_check
          %p1981 = pneg %p62
        $region30: #{tpu_custom_call.1} parent=23 // pred_check_branch
          %1983 = sbr.rel (%p1981) target = $region32
        $region31: #{tpu_custom_call.1} parent=23 // pred_region
          %s1985 = ssub.s32 1024, 1024
          %1986 = vsyncadd %s1977, %s1985
          %s1987 = smul.addr %s18, 8
          %s1988 = smul.addr %s1987, 128
          %s1989 = scalar_lea.hbm %s1, %s1988
          %s1990 = sshll.u32 %s1980, 4
          %s1991 = int_to_ptr.vmem [resolvable:$true] %s1990
          %1996 = dma.vmem_to_hbm [thread:$0]  %s1991, 1024, %s1989, %s1977, 128, 128, 8
        $region32: #{tpu_custom_call.1} parent=23 // pred_fallthru
          _
      $region24: #{tpu_custom_call.1} parent=5 // pred_fallthru
        _
      %p1997 = scmp.le.s32.totalorder 2, %s13
      // Predicated region
      $region33: #{tpu_custom_call.1} parent=5 // pred_check
        %p1998 = pneg %p1997
      $region34: #{tpu_custom_call.1} parent=5 // pred_check_branch
        %2000 = sbr.rel (%p1998) target = $region36
      $region35: #{tpu_custom_call.1} parent=5 // pred_region
        %s2001 = ssub.s32 %s13, 2
        // Predicated region
        $region37: #{tpu_custom_call.1} parent=35 // pred_check
          %p2002 = pneg %p68
        $region38: #{tpu_custom_call.1} parent=35 // pred_check_branch
          %2004 = sbr.rel (%p2002) target = $region40
        $region39: #{tpu_custom_call.1} parent=35 // pred_region
          %s2005 = sand.u32 %s53, 1
          %s2006 = scalar_lea.sflag [#allocation4], %s2005
          %s2007 = sand.u32 %s53, 1
          %s2008 = smul.addr %s2007, 64
          %s2009 = scalar_lea.vmem [#allocation5], %s2008
          %2010 = dma.done %s2006, 1024
        $region40: #{tpu_custom_call.1} parent=35 // pred_fallthru
          _
      $region36: #{tpu_custom_call.1} parent=5 // pred_fallthru
        _
    $region6: #{tpu_custom_call.1} parent=1 // loop_footer
      %s17 = sadd.s32 1, %s13
    $region7: #{tpu_custom_call.1} parent=1 // loop_footer_branch
      %12 = sbr.rel target = $region3
    $region8: #{tpu_custom_call.1} parent=1 // loop_exit
      _
    %2011 = vsyncpa [#allocation3], 1
    %s2012 = scalar_lea.sflag [#allocation3], 1
    %2013 = vsyncpa %s2012, 1
    %2014 = vsyncpa [#allocation4], 1
    %s2015 = scalar_lea.sflag [#allocation4], 1
    %2016 = vsyncpa %s2015, 1

</llo_original>
